<compile_context>
chip_gen: v7x
topology: tpu7x:2x2x1
jax: 0.10.0
libtpu: 0.0.40
codegen_flags: <defaults>
</compile_context>

<pallas_src>
import jax
import jax.numpy as jnp
from jax.experimental import pallas as pl
from jax.experimental.pallas import tpu as pltpu

BN_EPS = 1e-5
LANE = 128


def _round_up(x, m):
    return (x + m - 1) // m * m


def _vmem_limit_bytes():
    """Generation-aware scoped-VMEM budget (~3/4 of physical: v5e/v6e -> 96 MiB,
    v7x -> 48 MiB); conservative fallback if the hardware query is unavailable."""
    try:
        cap = int(pltpu.get_tpu_info().vmem_capacity_bytes)
        return max(32 * 1024 * 1024, min(cap * 3 // 4, 112 * 1024 * 1024))
    except Exception:  # pragma: no cover - defensive fallback
        return 48 * 1024 * 1024


def _make_conv_stats_kernel(K, cin_pad, ho, wo):
    """Pass 1: im2col-in-VMEM implicit-GEMM conv + per-image sum / sumsq partials."""
    kk_cin = K * K * cin_pad

    def kernel(x_ref, w_ref, y_ref, sum_ref, sumsq_ref, col_ref):
        # x_ref   : (1, Hp, Wp, Cin_pad)        padded image (compute dtype)
        # w_ref   : (Ckk_pad, Cout_pad)         flattened [kh, kw, cin] weight matrix
        # y_ref   : (Ho*Wo, Cout_pad)           raw conv output (compute dtype)
        # sum_ref / sumsq_ref : (1, 1, Cout_pad) per-IMAGE partial stats (f32)
        # col_ref : (Ho*Wo, Ckk_pad)            VMEM im2col scratch (compute dtype)
        ckk_pad = col_ref.shape[1]

        # Zero the contraction pad tail every step (cheap; the batch axis is
        # "parallel", so no single grid step is guaranteed to run first on a core).
        if ckk_pad > kk_cin:
            col_ref[:, kk_cin:ckk_pad] = jnp.zeros(
                (ho * wo, ckk_pad - kk_cin), col_ref.dtype)

        # Pack the K*K shifted windows of the resident image into the im2col tile
        # (column order [kh, kw, cin] matches the flattened weight).
        for kh in range(K):
            for kw in range(K):
                t = kh * K + kw
                patch = x_ref[0, kh:kh + ho, kw:kw + wo, :].reshape(ho * wo, cin_pad)
                col_ref[:, t * cin_pad:(t + 1) * cin_pad] = patch

        # One deep MXU matmul per image (contraction = Ckk_pad >= 128), f32 accum.
        acc = jnp.dot(col_ref[...], w_ref[...], preferred_element_type=jnp.float32)

        y_ref[...] = acc.astype(y_ref.dtype)
        sum_ref[...] = jnp.sum(acc, axis=0, keepdims=True).reshape(sum_ref.shape)
        sumsq_ref[...] = jnp.sum(acc * acc, axis=0, keepdims=True).reshape(sumsq_ref.shape)

    return kernel


def _bn_relu_kernel(y_ref, scale_ref, shift_ref, o_ref):
    # y_ref: (TILE_M, Cout_pad) compute dtype; scale/shift: (1, Cout_pad) f32 (zero in
    # pad lanes); o_ref: (TILE_M, Cout_pad) f32 -> fully lane-dense, unmasked stores.
    y = y_ref[...].astype(jnp.float32)
    o_ref[...] = jnp.maximum(y * scale_ref[...] + shift_ref[...], 0.0)


def conv_block_forward_nhwc(x_nhwc, w, b, gamma, beta, *,
                            kernel_size=3, padding=1, stride=1,
                            compute_dtype=jnp.bfloat16):
    """x_nhwc: (N, H, W, Cin).  w: (Cout, Cin, K, K).  Returns (N, Ho, Wo, Cout) f32."""
    del b  # conv bias cancels exactly under training-mode BatchNorm (see header).
    assert stride == 1  # TODO(synk): strided convolution not implemented in this kernel.
    N, H, W, Cin = x_nhwc.shape
    Cout = w.shape[0]
    K = kernel_size
    Hp, Wp = H + 2 * padding, W + 2 * padding
    Ho, Wo = Hp - K + 1, Wp - K + 1
    M = N * Ho * Wo

    # bf16 second-minor packing tile is 16; f32 is 8.
    sub = 16 if compute_dtype == jnp.bfloat16 else 8
    Cin_pad = _round_up(Cin, sub)
    Cout_pad = _round_up(Cout, LANE)                 # lane-dense output channels
    Ckk_pad = _round_up(K * K * Cin_pad, LANE)       # deep, lane-aligned contraction
    vmem_limit = _vmem_limit_bytes()

    # Cheap host prep: spatial zero-pad + channel pad only (no im2col duplication).
    xp = jnp.pad(x_nhwc, ((0, 0), (padding, padding), (padding, padding),
                          (0, Cin_pad - Cin))).astype(compute_dtype)
    wt = jnp.transpose(w, (2, 3, 1, 0))                                  # (K,K,Cin,Cout)
    wt = jnp.pad(wt, ((0, 0), (0, 0), (0, Cin_pad - Cin), (0, Cout_pad - Cout)))
    wt = wt.reshape(K * K * Cin_pad, Cout_pad)
    if Ckk_pad > K * K * Cin_pad:
        wt = jnp.pad(wt, ((0, Ckk_pad - K * K * Cin_pad), (0, 0)))
    wt = wt.astype(compute_dtype)

    # ---------------- pass 1: convolution + per-image batch statistics ----------------
    # TODO(synk): for very large single images, add halo-tiled H blocks (manual DMA) so
    # the per-step block stays within the v7x 64 MiB VMEM budget.
    y, psum, psumsq = pl.pallas_call(
        _make_conv_stats_kernel(K, Cin_pad, Ho, Wo),
        out_shape=(
            jax.ShapeDtypeStruct((M, Cout_pad), compute_dtype),      # bf16 y by default
            jax.ShapeDtypeStruct((N, 1, Cout_pad), jnp.float32),     # per-image sum
            jax.ShapeDtypeStruct((N, 1, Cout_pad), jnp.float32),     # per-image sumsq
        ),
        grid_spec=pltpu.PrefetchScalarGridSpec(
            num_scalar_prefetch=0,
            grid=(N,),
            in_specs=[
                pl.BlockSpec((1, Hp, Wp, Cin_pad), lambda n: (n, 0, 0, 0)),
                pl.BlockSpec((Ckk_pad, Cout_pad), lambda n: (0, 0)),
            ],
            out_specs=[
                pl.BlockSpec((Ho * Wo, Cout_pad), lambda n: (n, 0)),
                pl.BlockSpec((1, 1, Cout_pad), lambda n: (n, 0, 0)),
                pl.BlockSpec((1, 1, Cout_pad), lambda n: (n, 0, 0)),
            ],
            scratch_shapes=[pltpu.VMEM((Ho * Wo, Ckk_pad), compute_dtype)],
        ),
        compiler_params=pltpu.CompilerParams(
            dimension_semantics=("parallel",),   # no carried state -> shard across TCs
            vmem_limit_bytes=vmem_limit,
        ),
    )(xp, wt)

    # Combine per-image partials in f32 (tiny), fold training-mode BN into an affine.
    ch_sum = jnp.sum(psum[:, 0, :Cout], axis=0)
    ch_sumsq = jnp.sum(psumsq[:, 0, :Cout], axis=0)
    mean = ch_sum / M
    var = jnp.maximum(ch_sumsq / M - mean * mean, 0.0)   # biased (training-mode) variance
    scale = gamma * jax.lax.rsqrt(var + BN_EPS)
    shift = beta - mean * scale
    # Zero-pad to Cout_pad so padded lanes ReLU to exactly 0 (lane-dense stores).
    scale_pad = jnp.zeros((1, Cout_pad), jnp.float32).at[0, :Cout].set(scale)
    shift_pad = jnp.zeros((1, Cout_pad), jnp.float32).at[0, :Cout].set(shift)

    # ---------------- pass 2: normalize + ReLU (lane-dense, memory-bound) ----------------
    TILE_M = M if M <= 2048 else 2048
    out_pad = pl.pallas_call(
        _bn_relu_kernel,
        out_shape=jax.ShapeDtypeStruct((M, Cout_pad), jnp.float32),
        grid_spec=pltpu.PrefetchScalarGridSpec(
            num_scalar_prefetch=0,
            grid=(pl.cdiv(M, TILE_M),),
            in_specs=[
                pl.BlockSpec((TILE_M, Cout_pad), lambda i: (i, 0)),
                pl.BlockSpec((1, Cout_pad), lambda i: (0, 0)),
                pl.BlockSpec((1, Cout_pad), lambda i: (0, 0)),
            ],
            out_specs=pl.BlockSpec((TILE_M, Cout_pad), lambda i: (i, 0)),
        ),
        compiler_params=pltpu.CompilerParams(
            dimension_semantics=("parallel",),   # elementwise: shard across v7x's 2 TCs
            vmem_limit_bytes=vmem_limit,
        ),
    )(y, scale_pad, shift_pad)

    # Cheap XLA unpad of the lane-padded channels.
    return out_pad[:, :Cout].reshape(N, Ho, Wo, Cout)


def conv_block_forward(x_nchw, w, b, gamma, beta, **kwargs):
    """NCHW-facing adapter matching the PyTorch module. Prefer the NHWC entry point
    in a channels-last pipeline to avoid the two layout transposes."""
    x_nhwc = jnp.transpose(x_nchw, (0, 2, 3, 1))
    out = conv_block_forward_nhwc(x_nhwc, w, b, gamma, beta, **kwargs)
    return jnp.transpose(out, (0, 3, 1, 2))


def _reference(x, w, b, gamma, beta):
    """Pure-JAX reference matching torch: conv2d(pad=1, with bias) -> BN(train) -> ReLU."""
    y = jax.lax.conv_general_dilated(
        x, w, window_strides=(1, 1), padding=((1, 1), (1, 1)),
        dimension_numbers=("NCHW", "OIHW", "NCHW"),
    ) + b[None, :, None, None]
    mean = jnp.mean(y, axis=(0, 2, 3), keepdims=True)
    var = jnp.mean((y - mean) ** 2, axis=(0, 2, 3), keepdims=True)
    y_hat = (y - mean) * jax.lax.rsqrt(var + BN_EPS)
    out = y_hat * gamma[None, :, None, None] + beta[None, :, None, None]
    return jnp.maximum(out, 0.0)


if __name__ == "__main__":
    key = jax.random.PRNGKey(0)
    k_x, k_w, k_b, k_g, k_be = jax.random.split(key, 5)

    N, Cin, H, W = 2, 4, 16, 16
    Cout, K = 8, 3

    x = jax.random.normal(k_x, (N, Cin, H, W), dtype=jnp.float32)
    w = 0.1 * jax.random.normal(k_w, (Cout, Cin, K, K), dtype=jnp.float32)
    b = 0.05 * jax.random.normal(k_b, (Cout,), dtype=jnp.float32)
    gamma = 1.0 + 0.1 * jax.random.normal(k_g, (Cout,), dtype=jnp.float32)
    beta = 0.1 * jax.random.normal(k_be, (Cout,), dtype=jnp.float32)

    ref = _reference(x, w, b, gamma, beta)

    # f32 compute path: tight numerical check (also validates bias cancellation).
    out_f32 = jax.block_until_ready(
        conv_block_forward(x, w, b, gamma, beta, compute_dtype=jnp.float32))
    assert out_f32.shape == (N, Cout, H, W)
    err_f32 = float(jnp.max(jnp.abs(out_f32 - ref)))
    assert err_f32 < 2e-3, err_f32

    # Default bf16 path (bf16 MXU inputs + bf16 y intermediate, f32 stats): looser tol.
    out_bf16 = jax.block_until_ready(conv_block_forward(x, w, b, gamma, beta))
    assert out_bf16.shape == (N, Cout, H, W)
    err_bf16 = float(jnp.max(jnp.abs(out_bf16 - ref)))
    assert err_bf16 < 5e-2, err_bf16

    print("KERNEL_OK")
</pallas_src>

<mosaic_0001>
module attributes {stable_mosaic.version = 11 : i64} {
  func.func @kernel(%arg0: i32, %arg1: memref<1x18x18x8xf32, #tpu.memory_space<vmem>>, %arg2: memref<128x128xf32, #tpu.memory_space<vmem>>, %arg3: memref<256x128xf32, #tpu.memory_space<vmem>>, %arg4: memref<1x1x128xf32, #tpu.memory_space<vmem>>, %arg5: memref<1x1x128xf32, #tpu.memory_space<vmem>>, %arg6: memref<256x128xf32, #tpu.memory_space<vmem>>) attributes {dimension_semantics = [#tpu.dimension_semantics<parallel>], iteration_bounds = array<i64: 2>, scalar_prefetch = 0 : i64, scratch_operands = 1 : i64, tpu.core_type = #tpu.core_type<tc>, window_params = [{transform_indices = @transform_0, window_bounds = array<i64: 1, 18, 18, 8>}, {pipeline_mode = #tpu.pipeline_mode<synchronous>, transform_indices = @transform_1, window_bounds = array<i64: 128, 128>}, {transform_indices = @transform_2, window_bounds = array<i64: 256, 128>}, {transform_indices = @transform_3, window_bounds = array<i64: 1, 1, 128>}, {transform_indices = @transform_4, window_bounds = array<i64: 1, 1, 128>}]} {
    %cst = arith.constant 0.000000e+00 : f32
    %0 = vector.broadcast %cst : f32 to vector<256x56xf32>
    %c0 = arith.constant 0 : index
    %c72 = arith.constant 72 : index
    %1 = vector.load %arg6[%c0, %c72] : memref<256x128xf32, #tpu.memory_space<vmem>>, vector<256x56xf32>
    tpu.vector_store %arg6[%c0, %c72], %0 {strides = array<i32>} : memref<256x128xf32, #tpu.memory_space<vmem>>, vector<256x56xf32>,
    %c0_0 = arith.constant 0 : index
    %c0_1 = arith.constant 0 : index
    %c0_2 = arith.constant 0 : index
    %c0_3 = arith.constant 0 : index
    %2 = vector.load %arg1[%c0_0, %c0_1, %c0_2, %c0_3] : memref<1x18x18x8xf32, #tpu.memory_space<vmem>>, vector<1x16x16x8xf32>
    %3 = vector.shape_cast %2 : vector<1x16x16x8xf32> to vector<16x16x8xf32>
    %4 = vector.shape_cast %3 : vector<16x16x8xf32> to vector<256x8xf32>
    %c0_4 = arith.constant 0 : index
    %c0_5 = arith.constant 0 : index
    %5 = vector.load %arg6[%c0_4, %c0_5] : memref<256x128xf32, #tpu.memory_space<vmem>>, vector<256x8xf32>
    tpu.vector_store %arg6[%c0_4, %c0_5], %4 {strides = array<i32>} : memref<256x128xf32, #tpu.memory_space<vmem>>, vector<256x8xf32>,
    %c0_6 = arith.constant 0 : index
    %c0_7 = arith.constant 0 : index
    %c1 = arith.constant 1 : index
    %c0_8 = arith.constant 0 : index
    %6 = vector.load %arg1[%c0_6, %c0_7, %c1, %c0_8] : memref<1x18x18x8xf32, #tpu.memory_space<vmem>>, vector<1x16x16x8xf32>
    %7 = vector.shape_cast %6 : vector<1x16x16x8xf32> to vector<16x16x8xf32>
    %8 = vector.shape_cast %7 : vector<16x16x8xf32> to vector<256x8xf32>
    %c0_9 = arith.constant 0 : index
    %c8 = arith.constant 8 : index
    %9 = vector.load %arg6[%c0_9, %c8] : memref<256x128xf32, #tpu.memory_space<vmem>>, vector<256x8xf32>
    tpu.vector_store %arg6[%c0_9, %c8], %8 {strides = array<i32>} : memref<256x128xf32, #tpu.memory_space<vmem>>, vector<256x8xf32>,
    %c0_10 = arith.constant 0 : index
    %c0_11 = arith.constant 0 : index
    %c2 = arith.constant 2 : index
    %c0_12 = arith.constant 0 : index
    %10 = vector.load %arg1[%c0_10, %c0_11, %c2, %c0_12] : memref<1x18x18x8xf32, #tpu.memory_space<vmem>>, vector<1x16x16x8xf32>
    %11 = vector.shape_cast %10 : vector<1x16x16x8xf32> to vector<16x16x8xf32>
    %12 = vector.shape_cast %11 : vector<16x16x8xf32> to vector<256x8xf32>
    %c0_13 = arith.constant 0 : index
    %c16 = arith.constant 16 : index
    %13 = vector.load %arg6[%c0_13, %c16] : memref<256x128xf32, #tpu.memory_space<vmem>>, vector<256x8xf32>
    tpu.vector_store %arg6[%c0_13, %c16], %12 {strides = array<i32>} : memref<256x128xf32, #tpu.memory_space<vmem>>, vector<256x8xf32>,
    %c0_14 = arith.constant 0 : index
    %c1_15 = arith.constant 1 : index
    %c0_16 = arith.constant 0 : index
    %c0_17 = arith.constant 0 : index
    %14 = vector.load %arg1[%c0_14, %c1_15, %c0_16, %c0_17] : memref<1x18x18x8xf32, #tpu.memory_space<vmem>>, vector<1x16x16x8xf32>
    %15 = vector.shape_cast %14 : vector<1x16x16x8xf32> to vector<16x16x8xf32>
    %16 = vector.shape_cast %15 : vector<16x16x8xf32> to vector<256x8xf32>
    %c0_18 = arith.constant 0 : index
    %c24 = arith.constant 24 : index
    %17 = vector.load %arg6[%c0_18, %c24] : memref<256x128xf32, #tpu.memory_space<vmem>>, vector<256x8xf32>
    tpu.vector_store %arg6[%c0_18, %c24], %16 {strides = array<i32>} : memref<256x128xf32, #tpu.memory_space<vmem>>, vector<256x8xf32>,
    %c0_19 = arith.constant 0 : index
    %c1_20 = arith.constant 1 : index
    %c1_21 = arith.constant 1 : index
    %c0_22 = arith.constant 0 : index
    %18 = vector.load %arg1[%c0_19, %c1_20, %c1_21, %c0_22] : memref<1x18x18x8xf32, #tpu.memory_space<vmem>>, vector<1x16x16x8xf32>
    %19 = vector.shape_cast %18 : vector<1x16x16x8xf32> to vector<16x16x8xf32>
    %20 = vector.shape_cast %19 : vector<16x16x8xf32> to vector<256x8xf32>
    %c0_23 = arith.constant 0 : index
    %c32 = arith.constant 32 : index
    %21 = vector.load %arg6[%c0_23, %c32] : memref<256x128xf32, #tpu.memory_space<vmem>>, vector<256x8xf32>
    tpu.vector_store %arg6[%c0_23, %c32], %20 {strides = array<i32>} : memref<256x128xf32, #tpu.memory_space<vmem>>, vector<256x8xf32>,
    %c0_24 = arith.constant 0 : index
    %c1_25 = arith.constant 1 : index
    %c2_26 = arith.constant 2 : index
    %c0_27 = arith.constant 0 : index
    %22 = vector.load %arg1[%c0_24, %c1_25, %c2_26, %c0_27] : memref<1x18x18x8xf32, #tpu.memory_space<vmem>>, vector<1x16x16x8xf32>
    %23 = vector.shape_cast %22 : vector<1x16x16x8xf32> to vector<16x16x8xf32>
    %24 = vector.shape_cast %23 : vector<16x16x8xf32> to vector<256x8xf32>
    %c0_28 = arith.constant 0 : index
    %c40 = arith.constant 40 : index
    %25 = vector.load %arg6[%c0_28, %c40] : memref<256x128xf32, #tpu.memory_space<vmem>>, vector<256x8xf32>
    tpu.vector_store %arg6[%c0_28, %c40], %24 {strides = array<i32>} : memref<256x128xf32, #tpu.memory_space<vmem>>, vector<256x8xf32>,
    %c0_29 = arith.constant 0 : index
    %c2_30 = arith.constant 2 : index
    %c0_31 = arith.constant 0 : index
    %c0_32 = arith.constant 0 : index
    %26 = vector.load %arg1[%c0_29, %c2_30, %c0_31, %c0_32] : memref<1x18x18x8xf32, #tpu.memory_space<vmem>>, vector<1x16x16x8xf32>
    %27 = vector.shape_cast %26 : vector<1x16x16x8xf32> to vector<16x16x8xf32>
    %28 = vector.shape_cast %27 : vector<16x16x8xf32> to vector<256x8xf32>
    %c0_33 = arith.constant 0 : index
    %c48 = arith.constant 48 : index
    %29 = vector.load %arg6[%c0_33, %c48] : memref<256x128xf32, #tpu.memory_space<vmem>>, vector<256x8xf32>
    tpu.vector_store %arg6[%c0_33, %c48], %28 {strides = array<i32>} : memref<256x128xf32, #tpu.memory_space<vmem>>, vector<256x8xf32>,
    %c0_34 = arith.constant 0 : index
    %c2_35 = arith.constant 2 : index
    %c1_36 = arith.constant 1 : index
    %c0_37 = arith.constant 0 : index
    %30 = vector.load %arg1[%c0_34, %c2_35, %c1_36, %c0_37] : memref<1x18x18x8xf32, #tpu.memory_space<vmem>>, vector<1x16x16x8xf32>
    %31 = vector.shape_cast %30 : vector<1x16x16x8xf32> to vector<16x16x8xf32>
    %32 = vector.shape_cast %31 : vector<16x16x8xf32> to vector<256x8xf32>
    %c0_38 = arith.constant 0 : index
    %c56 = arith.constant 56 : index
    %33 = vector.load %arg6[%c0_38, %c56] : memref<256x128xf32, #tpu.memory_space<vmem>>, vector<256x8xf32>
    tpu.vector_store %arg6[%c0_38, %c56], %32 {strides = array<i32>} : memref<256x128xf32, #tpu.memory_space<vmem>>, vector<256x8xf32>,
    %c0_39 = arith.constant 0 : index
    %c2_40 = arith.constant 2 : index
    %c2_41 = arith.constant 2 : index
    %c0_42 = arith.constant 0 : index
    %34 = vector.load %arg1[%c0_39, %c2_40, %c2_41, %c0_42] : memref<1x18x18x8xf32, #tpu.memory_space<vmem>>, vector<1x16x16x8xf32>
    %35 = vector.shape_cast %34 : vector<1x16x16x8xf32> to vector<16x16x8xf32>
    %36 = vector.shape_cast %35 : vector<16x16x8xf32> to vector<256x8xf32>
    %c0_43 = arith.constant 0 : index
    %c64 = arith.constant 64 : index
    %37 = vector.load %arg6[%c0_43, %c64] : memref<256x128xf32, #tpu.memory_space<vmem>>, vector<256x8xf32>
    tpu.vector_store %arg6[%c0_43, %c64], %36 {strides = array<i32>} : memref<256x128xf32, #tpu.memory_space<vmem>>, vector<256x8xf32>,
    %c0_44 = arith.constant 0 : index
    %c0_45 = arith.constant 0 : index
    %38 = vector.load %arg6[%c0_44, %c0_45] : memref<256x128xf32, #tpu.memory_space<vmem>>, vector<256x128xf32>
    %c0_46 = arith.constant 0 : index
    %c0_47 = arith.constant 0 : index
    %39 = vector.load %arg2[%c0_46, %c0_47] : memref<128x128xf32, #tpu.memory_space<vmem>>, vector<128x128xf32>
    %cst_48 = arith.constant dense<0.000000e+00> : vector<256x128xf32>
    %40 = tpu.matmul %38, %39, %cst_48 {dimension_numbers = #tpu.dot_dimension_numbers<[1], [0], [0], [1], [0, 0, 1, 1], [], []>} : vector<256x128xf32>, vector<128x128xf32>, vector<256x128xf32> -> vector<256x128xf32>
    %c0_49 = arith.constant 0 : index
    %c0_50 = arith.constant 0 : index
    %41 = vector.load %arg3[%c0_49, %c0_50] : memref<256x128xf32, #tpu.memory_space<vmem>>, vector<256x128xf32>
    tpu.vector_store %arg3[%c0_49, %c0_50], %40 {strides = array<i32>} : memref<256x128xf32, #tpu.memory_space<vmem>>, vector<256x128xf32>,
    %cst_51 = arith.constant dense<0.000000e+00> : vector<128xf32>
    %42 = vector.multi_reduction <add>, %40, %cst_51 [0] : vector<256x128xf32> to vector<128xf32>
    %43 = vector.shape_cast %42 : vector<128xf32> to vector<1x128xf32>
    %44 = vector.shape_cast %43 : vector<1x128xf32> to vector<1x1x128xf32>
    %c0_52 = arith.constant 0 : index
    %c0_53 = arith.constant 0 : index
    %c0_54 = arith.constant 0 : index
    %45 = vector.load %arg4[%c0_52, %c0_53, %c0_54] : memref<1x1x128xf32, #tpu.memory_space<vmem>>, vector<1x1x128xf32>
    tpu.vector_store %arg4[%c0_52, %c0_53, %c0_54], %44 {strides = array<i32>} : memref<1x1x128xf32, #tpu.memory_space<vmem>>, vector<1x1x128xf32>,
    %46 = arith.mulf %40, %40 : vector<256x128xf32>
    %cst_55 = arith.constant dense<0.000000e+00> : vector<128xf32>
    %47 = vector.multi_reduction <add>, %46, %cst_55 [0] : vector<256x128xf32> to vector<128xf32>
    %48 = vector.shape_cast %47 : vector<128xf32> to vector<1x128xf32>
    %49 = vector.shape_cast %48 : vector<1x128xf32> to vector<1x1x128xf32>
    %c0_56 = arith.constant 0 : index
    %c0_57 = arith.constant 0 : index
    %c0_58 = arith.constant 0 : index
    %50 = vector.load %arg5[%c0_56, %c0_57, %c0_58] : memref<1x1x128xf32, #tpu.memory_space<vmem>>, vector<1x1x128xf32>
    tpu.vector_store %arg5[%c0_56, %c0_57, %c0_58], %49 {strides = array<i32>} : memref<1x1x128xf32, #tpu.memory_space<vmem>>, vector<1x1x128xf32>,
    return
  }
  func.func @transform_0(%arg0: i32) -> (i32, i32, i32, i32) {
    %c0_i32 = arith.constant 0 : i32
    %c0_i32_0 = arith.constant 0 : i32
    %c0_i32_1 = arith.constant 0 : i32
    %c0_i32_2 = arith.constant 0 : i32
    return %arg0, %c0_i32, %c0_i32_0, %c0_i32_1 : i32, i32, i32, i32
  }
  func.func @transform_1(%arg0: i32) -> (i32, i32) {
    %c0_i32 = arith.constant 0 : i32
    %c0_i32_0 = arith.constant 0 : i32
    %c0_i32_1 = arith.constant 0 : i32
    return %c0_i32, %c0_i32_0 : i32, i32
  }
  func.func @transform_2(%arg0: i32) -> (i32, i32) {
    %c0_i32 = arith.constant 0 : i32
    %c0_i32_0 = arith.constant 0 : i32
    return %arg0, %c0_i32 : i32, i32
  }
  func.func @transform_3(%arg0: i32) -> (i32, i32, i32) {
    %c0_i32 = arith.constant 0 : i32
    %c0_i32_0 = arith.constant 0 : i32
    %c0_i32_1 = arith.constant 0 : i32
    return %arg0, %c0_i32, %c0_i32_0 : i32, i32, i32
  }
  func.func @transform_4(%arg0: i32) -> (i32, i32, i32) {
    %c0_i32 = arith.constant 0 : i32
    %c0_i32_0 = arith.constant 0 : i32
    %c0_i32_1 = arith.constant 0 : i32
    return %arg0, %c0_i32, %c0_i32_0 : i32, i32, i32
  }
}

</mosaic_0001>

<llo_original>
// kernel: tpu_custom_call.1
$region0: #{tpu_custom_call.1}
  #allocation0 [shape = 'u32[]', space=smem, size = 0x4, offset = 0x4, fixed_abs, tag = 'smem constant byte address 0x4 - core index']
  #allocation1 [shape = 'u32[144,128]{1,0:T(1,128)}', space=vmem, size = 0x12000, scoped, tag = 'internal scratch']
  #allocation2 [shape = 'f32[256,128]{1,0:T(8,128)}', space=vmem, size = 0x20000, scoped, tag = 'scratch operand']
  %s0 = inlined_call_operand.vmem [shape: f32[2,18,18,8], index: 0, kind: input, shape index: {}]
  %s1 = inlined_call_operand.vmem [shape: f32[128,128], index: 1, kind: input, shape index: {}]
  %s2 = inlined_call_operand.hbm [shape: f32[512,128], index: 2, kind: output, shape index: {0}]
  %s3 = inlined_call_operand.hbm [shape: f32[2,1,128], index: 3, kind: output, shape index: {1}]
  %s4 = inlined_call_operand.hbm [shape: f32[2,1,128], index: 4, kind: output, shape index: {2}]
  %5 = xla_tuple %s2, %s3, %s4
  %s6 = sld [smem:[#allocation0]]
  $region57: #{tpu_custom_call.1} parent=0
    _
  %s8 = ssub.s32 1, %s6
  %s9 = scalar_select 0, %s8, %s6
  $region1: #{tpu_custom_call.1} parent=0
    #allocation3 [shape = 'u8[262144]{0}', space=vmem, size = 0x40000, scoped, tag = 'output window, operand 0']
    #allocation4 [shape = 's32[2]{0}', space=sflag, size = 0x8, scoped, tag = 'scoped memory for tpu_custom_call.1']
    #allocation5 [shape = 'u8[1024]{0}', space=vmem, size = 0x400, scoped, tag = 'output window, operand 1']
    #allocation6 [shape = 's32[2]{0}', space=sflag, size = 0x8, scoped, tag = 'scoped memory for tpu_custom_call.1']
    #allocation7 [shape = 'u8[1024]{0}', space=vmem, size = 0x400, scoped, tag = 'output window, operand 2']
    %10 = vsyncpa [#allocation4], 0
    %s11 = scalar_lea.sflag [#allocation4], 1
    %12 = vsyncpa %s11, 0
    %13 = vsyncpa [#allocation6], 0
    %s14 = scalar_lea.sflag [#allocation6], 1
    %15 = vsyncpa %s14, 0
    loop: start=0, step=1, limit=4
    $region2: #{tpu_custom_call.1} parent=1 // loop_pre_header
      _
    $region3: #{tpu_custom_call.1} parent=1 // loop_header
      %s17 = sphi 0, %s21
      %p18 = scmp.ge.s32.totalorder %s17, 4
      %s27 = sphi 0, %s29
      %s30 = sphi 0, %s27
      %s31 = sphi 0, %s30
      %s47 = sphi 0, %s31
      %s51 = sphi 0, %s51
      %s53 = sphi 0, %s51
      %s54 = sphi 0, %s53
      %s68 = sphi 0, %s54
      %s74 = sphi 0, %s76
      %s77 = sphi 0, %s74
      %s78 = sphi 0, %s77
      %s94 = sphi 0, %s78
      %s100 = sphi 0, %s102
      %s103 = sphi 0, %s100
      %s104 = sphi 0, %s103
      %s120 = sphi 0, %s104
      %s126 = sphi 0, %s128
      %s129 = sphi 0, %s126
      %s130 = sphi 0, %s129
      %s146 = sphi 0, %s130
    $region4: #{tpu_custom_call.1} parent=1 // loop_header_branch
      %20 = sbr.rel (%p18) target = $region8
    $region5: #{tpu_custom_call.1} parent=1 // loop_body
      %s22 = ssub.s32 %s17, 1
      %s23 = ssub.s32 %s17, 2
      %s24 = sadd.s32 %s17, 1
      %s25 = ssub.s32 %s17, %s24
      %p26 = scmp.eq.s32.totalorder %s25, 0
      %s28 = sadd.s32 %s27, 1
      %s29 = scalar_select %p26, %s27, %s28
      %p32 = pneg %p26
      %p33 = scmp.eq.s32.totalorder %s17, 1
      %p34 = por %p32, %p33
      %p35 = scmp.ne.s32.totalorder %s27, %s30
      %p36 = scmp.eq.s32.totalorder %s17, 0
      %p37 = por %p35, %p36
      %p38 = scmp.ne.s32.totalorder %s27, %s30
      %p39 = scmp.eq.s32.totalorder %s22, 1
      %p40 = por %p38, %p39
      %p41 = scmp.ne.s32.totalorder %s30, %s31
      %p42 = scmp.eq.s32.totalorder %s22, 0
      %p43 = por %p41, %p42
      %p44 = scmp.ne.s32.totalorder %s30, %s31
      %p45 = scmp.eq.s32.totalorder %s23, 1
      %p46 = por %p44, %p45
      %p48 = scmp.ne.s32.totalorder %s31, %s47
      %p49 = scmp.eq.s32.totalorder %s23, 0
      %p50 = por %p48, %p49
      %s52 = sadd.s32 %s51, 1
      %p55 = scmp.eq.s32.totalorder %s17, 1
      %p56 = scmp.ne.s32.totalorder %s51, %s53
      %p57 = scmp.eq.s32.totalorder %s17, 0
      %p58 = por %p56, %p57
      %p59 = scmp.ne.s32.totalorder %s51, %s53
      %p60 = scmp.eq.s32.totalorder %s22, 1
      %p61 = por %p59, %p60
      %p62 = scmp.ne.s32.totalorder %s53, %s54
      %p63 = scmp.eq.s32.totalorder %s22, 0
      %p64 = por %p62, %p63
      %p65 = scmp.ne.s32.totalorder %s53, %s54
      %p66 = scmp.eq.s32.totalorder %s23, 1
      %p67 = por %p65, %p66
      %p69 = scmp.ne.s32.totalorder %s54, %s68
      %p70 = scmp.eq.s32.totalorder %s23, 0
      %p71 = por %p69, %p70
      %s72 = ssub.s32 %s17, %s24
      %p73 = scmp.eq.s32.totalorder %s72, 0
      %s75 = sadd.s32 %s74, 1
      %s76 = scalar_select %p73, %s74, %s75
      %p79 = pneg %p73
      %p80 = scmp.eq.s32.totalorder %s17, 1
      %p81 = por %p79, %p80
      %p82 = scmp.ne.s32.totalorder %s74, %s77
      %p83 = scmp.eq.s32.totalorder %s17, 0
      %p84 = por %p82, %p83
      %p85 = scmp.ne.s32.totalorder %s74, %s77
      %p86 = scmp.eq.s32.totalorder %s22, 1
      %p87 = por %p85, %p86
      %p88 = scmp.ne.s32.totalorder %s77, %s78
      %p89 = scmp.eq.s32.totalorder %s22, 0
      %p90 = por %p88, %p89
      %p91 = scmp.ne.s32.totalorder %s77, %s78
      %p92 = scmp.eq.s32.totalorder %s23, 1
      %p93 = por %p91, %p92
      %p95 = scmp.ne.s32.totalorder %s78, %s94
      %p96 = scmp.eq.s32.totalorder %s23, 0
      %p97 = por %p95, %p96
      %s98 = ssub.s32 %s17, %s24
      %p99 = scmp.eq.s32.totalorder %s98, 0
      %s101 = sadd.s32 %s100, 1
      %s102 = scalar_select %p99, %s100, %s101
      %p105 = pneg %p99
      %p106 = scmp.eq.s32.totalorder %s17, 1
      %p107 = por %p105, %p106
      %p108 = scmp.ne.s32.totalorder %s100, %s103
      %p109 = scmp.eq.s32.totalorder %s17, 0
      %p110 = por %p108, %p109
      %p111 = scmp.ne.s32.totalorder %s100, %s103
      %p112 = scmp.eq.s32.totalorder %s22, 1
      %p113 = por %p111, %p112
      %p114 = scmp.ne.s32.totalorder %s103, %s104
      %p115 = scmp.eq.s32.totalorder %s22, 0
      %p116 = por %p114, %p115
      %p117 = scmp.ne.s32.totalorder %s103, %s104
      %p118 = scmp.eq.s32.totalorder %s23, 1
      %p119 = por %p117, %p118
      %p121 = scmp.ne.s32.totalorder %s104, %s120
      %p122 = scmp.eq.s32.totalorder %s23, 0
      %p123 = por %p121, %p122
      %s124 = ssub.s32 %s17, %s24
      %p125 = scmp.eq.s32.totalorder %s124, 0
      %s127 = sadd.s32 %s126, 1
      %s128 = scalar_select %p125, %s126, %s127
      %p131 = pneg %p125
      %p132 = scmp.eq.s32.totalorder %s17, 1
      %p133 = por %p131, %p132
      %p134 = scmp.ne.s32.totalorder %s126, %s129
      %p135 = scmp.eq.s32.totalorder %s17, 0
      %p136 = por %p134, %p135
      %p137 = scmp.ne.s32.totalorder %s126, %s129
      %p138 = scmp.eq.s32.totalorder %s22, 1
      %p139 = por %p137, %p138
      %p140 = scmp.ne.s32.totalorder %s129, %s130
      %p141 = scmp.eq.s32.totalorder %s22, 0
      %p142 = por %p140, %p141
      %p143 = scmp.ne.s32.totalorder %s129, %s130
      %p144 = scmp.eq.s32.totalorder %s23, 1
      %p145 = por %p143, %p144
      %p147 = scmp.ne.s32.totalorder %s130, %s146
      %p148 = scmp.eq.s32.totalorder %s23, 0
      %p149 = por %p147, %p148
      %p150 = scmp.le.s32.totalorder 1, %s17
      %p151 = scmp.lt.s32.totalorder %s17, 3
      %p152 = pnand %p150, %p151
      %p153 = pneg %p152
      // Predicated region
      $region9: #{tpu_custom_call.1} parent=5 // pred_check
        _
      $region10: #{tpu_custom_call.1} parent=5 // pred_check_branch
        %155 = sbr.rel (%p152) target = $region12
      $region11: #{tpu_custom_call.1} parent=5 // pred_region
        %s156 = ssub.s32 %s17, 1
        // Predicated region
        $region13: #{tpu_custom_call.1} parent=11 // pred_check
          %p157 = pneg %p64
        $region14: #{tpu_custom_call.1} parent=11 // pred_check_branch
          %159 = sbr.rel (%p157) target = $region16
        $region15: #{tpu_custom_call.1} parent=11 // pred_region
          _
        $region16: #{tpu_custom_call.1} parent=11 // pred_fallthru
          _
      $region12: #{tpu_custom_call.1} parent=5 // pred_fallthru
        _
      %p160 = scmp.lt.s32.totalorder %s17, 2
      // Predicated region
      $region17: #{tpu_custom_call.1} parent=5 // pred_check
        %p161 = pneg %p160
      $region18: #{tpu_custom_call.1} parent=5 // pred_check_branch
        %163 = sbr.rel (%p161) target = $region20
      $region19: #{tpu_custom_call.1} parent=5 // pred_region
        // Predicated region
        $region21: #{tpu_custom_call.1} parent=19 // pred_check
          %p164 = pneg %p37
        $region22: #{tpu_custom_call.1} parent=19 // pred_check_branch
          %166 = sbr.rel (%p164) target = $region24
        $region23: #{tpu_custom_call.1} parent=19 // pred_region
          %p167 = scmp.lt.s32.totalorder %s17, 1
          %s168 = scalar_select %p167, %s17, 1
          %s169 = smul.addr %s168, 54
          %s170 = smul.addr %s169, 8
          %s171 = scalar_lea.vmem %s0, %s170
        $region24: #{tpu_custom_call.1} parent=19 // pred_fallthru
          _
      $region20: #{tpu_custom_call.1} parent=5 // pred_fallthru
        _
      %p172 = scmp.le.s32.totalorder 1, %s17
      %p173 = scmp.lt.s32.totalorder %s17, 3
      %p174 = pnand %p172, %p173
      %p175 = pneg %p174
      // Predicated region
      $region25: #{tpu_custom_call.1} parent=5 // pred_check
        _
      $region26: #{tpu_custom_call.1} parent=5 // pred_check_branch
        %177 = sbr.rel (%p174) target = $region28
      $region27: #{tpu_custom_call.1} parent=5 // pred_region
        %s178 = ssub.s32 %s17, 1
        %p179 = scmp.lt.s32.totalorder %s22, 1
        %s180 = scalar_select %p179, %s22, 1
        %s181 = smul.addr %s180, 54
        %s182 = smul.addr %s181, 8
        %s183 = scalar_lea.vmem %s0, %s182
        %p184 = pneg %p43
        %p185 = pneg %p40
        %p186 = pneg %p64
        %p187 = pneg %p61
        %p188 = pneg %p90
        %p189 = pneg %p87
        %s190 = sand.u32 %s77, 1
        %s191 = scalar_lea.sflag [#allocation4], %s190
        %s192 = sand.u32 %s77, 1
        %s193 = smul.addr %s192, 256
        %s194 = scalar_lea.vmem [#allocation3], %s193
        %p195 = pneg %p116
        %p196 = pneg %p113
        %s197 = sand.u32 %s22, 1
        %s198 = scalar_lea.sflag [#allocation6], %s197
        %s199 = sand.u32 %s103, 1
        %s200 = scalar_lea.vmem [#allocation5], %s199
        %p201 = pneg %p142
        %p202 = pneg %p139
        %s203 = sand.u32 %s22, 1
        %s204 = scalar_lea.sflag [#allocation6], %s203
        %s205 = sand.u32 %s129, 1
        %s206 = scalar_lea.vmem [#allocation7], %s205
        %p207 = scmp.lt.s32.totalorder %s22, 1
        %s208 = scalar_select %p207, %s22, 1
        %s209 = smul.addr %s208, 54
        %s210 = smul.addr %s209, 8
        %s211 = scalar_lea.vmem %s0, %s210
        %s212 = smul.u32 32, %s22
        %vm213 = vcmask 1048128
        %214 = vst.msk [vmem:[#allocation2] sm:$0xff] %vm213, 0.0
        %215 = vst.msk [vmem:[#allocation2 + $0x8] sm:$0xff] %vm213, 0.0
        %216 = vst.msk [vmem:[#allocation2 + $0x10] sm:$0xff] %vm213, 0.0
        %217 = vst.msk [vmem:[#allocation2 + $0x18] sm:$0xff] %vm213, 0.0
        %218 = vst.msk [vmem:[#allocation2 + $0x20] sm:$0xff] %vm213, 0.0
        %219 = vst.msk [vmem:[#allocation2 + $0x28] sm:$0xff] %vm213, 0.0
        %220 = vst.msk [vmem:[#allocation2 + $0x30] sm:$0xff] %vm213, 0.0
        %221 = vst.msk [vmem:[#allocation2 + $0x38] sm:$0xff] %vm213, 0.0
        %222 = vst.msk [vmem:[#allocation2 + $0x40] sm:$0xff] %vm213, 0.0
        %223 = vst.msk [vmem:[#allocation2 + $0x48] sm:$0xff] %vm213, 0.0
        %224 = vst.msk [vmem:[#allocation2 + $0x50] sm:$0xff] %vm213, 0.0
        %225 = vst.msk [vmem:[#allocation2 + $0x58] sm:$0xff] %vm213, 0.0
        %226 = vst.msk [vmem:[#allocation2 + $0x60] sm:$0xff] %vm213, 0.0
        %227 = vst.msk [vmem:[#allocation2 + $0x68] sm:$0xff] %vm213, 0.0
        %228 = vst.msk [vmem:[#allocation2 + $0x70] sm:$0xff] %vm213, 0.0
        %229 = vst.msk [vmem:[#allocation2 + $0x78] sm:$0xff] %vm213, 0.0
        %230 = vst.msk [vmem:[#allocation2 + $0x80] sm:$0xff] %vm213, 0.0
        %231 = vst.msk [vmem:[#allocation2 + $0x88] sm:$0xff] %vm213, 0.0
        %232 = vst.msk [vmem:[#allocation2 + $0x90] sm:$0xff] %vm213, 0.0
        %233 = vst.msk [vmem:[#allocation2 + $0x98] sm:$0xff] %vm213, 0.0
        %234 = vst.msk [vmem:[#allocation2 + $0xa0] sm:$0xff] %vm213, 0.0
        %235 = vst.msk [vmem:[#allocation2 + $0xa8] sm:$0xff] %vm213, 0.0
        %236 = vst.msk [vmem:[#allocation2 + $0xb0] sm:$0xff] %vm213, 0.0
        %237 = vst.msk [vmem:[#allocation2 + $0xb8] sm:$0xff] %vm213, 0.0
        %238 = vst.msk [vmem:[#allocation2 + $0xc0] sm:$0xff] %vm213, 0.0
        %239 = vst.msk [vmem:[#allocation2 + $0xc8] sm:$0xff] %vm213, 0.0
        %240 = vst.msk [vmem:[#allocation2 + $0xd0] sm:$0xff] %vm213, 0.0
        %241 = vst.msk [vmem:[#allocation2 + $0xd8] sm:$0xff] %vm213, 0.0
        %242 = vst.msk [vmem:[#allocation2 + $0xe0] sm:$0xff] %vm213, 0.0
        %243 = vst.msk [vmem:[#allocation2 + $0xe8] sm:$0xff] %vm213, 0.0
        %244 = vst.msk [vmem:[#allocation2 + $0xf0] sm:$0xff] %vm213, 0.0
        %245 = vst.msk [vmem:[#allocation2 + $0xf8] sm:$0xff] %vm213, 0.0
        %v246 = vld [vmem:[%s211] sm:$0xff]
        %v247 = vld [vmem:[%s211 + $0x8] sm:$0xff]
        %v248 = vld [vmem:[%s211 + $0x18] sm:$0xff]
        %v249 = vld [vmem:[%s211 + $0x20] sm:$0xff]
        %v250 = vld [vmem:[%s211 + $0x30] sm:$0xff]
        %v251 = vld [vmem:[%s211 + $0x38] sm:$0xff]
        %v252 = vld [vmem:[%s211 + $0x48] sm:$0xff]
        %v253 = vld [vmem:[%s211 + $0x50] sm:$0xff]
        %v254 = vld [vmem:[%s211 + $0x60] sm:$0xff]
        %v255 = vld [vmem:[%s211 + $0x68] sm:$0xff]
        %v256 = vld [vmem:[%s211 + $0x78] sm:$0xff]
        %v257 = vld [vmem:[%s211 + $0x80] sm:$0xff]
        %v258 = vld [vmem:[%s211 + $0x90] sm:$0xff]
        %v259 = vld [vmem:[%s211 + $0x98] sm:$0xff]
        %v260 = vld [vmem:[%s211 + $0xa8] sm:$0xff]
        %v261 = vld [vmem:[%s211 + $0xb0] sm:$0xff]
        %v262 = vld [vmem:[%s211 + $0xc0] sm:$0xff]
        %v263 = vld [vmem:[%s211 + $0xc8] sm:$0xff]
        %v264 = vld [vmem:[%s211 + $0xd8] sm:$0xff]
        %v265 = vld [vmem:[%s211 + $0xe0] sm:$0xff]
        %v266 = vld [vmem:[%s211 + $0xf0] sm:$0xff]
        %v267 = vld [vmem:[%s211 + $0xf8] sm:$0xff]
        %v268 = vld [vmem:[%s211 + $0x108] sm:$0xff]
        %v269 = vld [vmem:[%s211 + $0x110] sm:$0xff]
        %v270 = vld [vmem:[%s211 + $0x120] sm:$0xff]
        %v271 = vld [vmem:[%s211 + $0x128] sm:$0xff]
        %v272 = vld [vmem:[%s211 + $0x138] sm:$0xff]
        %v273 = vld [vmem:[%s211 + $0x140] sm:$0xff]
        %v274 = vld [vmem:[%s211 + $0x150] sm:$0xff]
        %v275 = vld [vmem:[%s211 + $0x158] sm:$0xff]
        %v276 = vld [vmem:[%s211 + $0x168] sm:$0xff]
        %v277 = vld [vmem:[%s211 + $0x170] sm:$0xff]
        %vm278 = vcmask 64512
        %279 = vst.msk [vmem:[#allocation2] sm:$0xff] %vm278, %v246
        %280 = vst.msk [vmem:[#allocation2 + $0x8] sm:$0xff] %vm278, %v247
        %281 = vst.msk [vmem:[#allocation2 + $0x10] sm:$0xff] %vm278, %v248
        %282 = vst.msk [vmem:[#allocation2 + $0x18] sm:$0xff] %vm278, %v249
        %283 = vst.msk [vmem:[#allocation2 + $0x20] sm:$0xff] %vm278, %v250
        %284 = vst.msk [vmem:[#allocation2 + $0x28] sm:$0xff] %vm278, %v251
        %285 = vst.msk [vmem:[#allocation2 + $0x30] sm:$0xff] %vm278, %v252
        %286 = vst.msk [vmem:[#allocation2 + $0x38] sm:$0xff] %vm278, %v253
        %287 = vst.msk [vmem:[#allocation2 + $0x40] sm:$0xff] %vm278, %v254
        %288 = vst.msk [vmem:[#allocation2 + $0x48] sm:$0xff] %vm278, %v255
        %289 = vst.msk [vmem:[#allocation2 + $0x50] sm:$0xff] %vm278, %v256
        %290 = vst.msk [vmem:[#allocation2 + $0x58] sm:$0xff] %vm278, %v257
        %291 = vst.msk [vmem:[#allocation2 + $0x60] sm:$0xff] %vm278, %v258
        %292 = vst.msk [vmem:[#allocation2 + $0x68] sm:$0xff] %vm278, %v259
        %293 = vst.msk [vmem:[#allocation2 + $0x70] sm:$0xff] %vm278, %v260
        %294 = vst.msk [vmem:[#allocation2 + $0x78] sm:$0xff] %vm278, %v261
        %295 = vst.msk [vmem:[#allocation2 + $0x80] sm:$0xff] %vm278, %v262
        %296 = vst.msk [vmem:[#allocation2 + $0x88] sm:$0xff] %vm278, %v263
        %297 = vst.msk [vmem:[#allocation2 + $0x90] sm:$0xff] %vm278, %v264
        %298 = vst.msk [vmem:[#allocation2 + $0x98] sm:$0xff] %vm278, %v265
        %299 = vst.msk [vmem:[#allocation2 + $0xa0] sm:$0xff] %vm278, %v266
        %300 = vst.msk [vmem:[#allocation2 + $0xa8] sm:$0xff] %vm278, %v267
        %301 = vst.msk [vmem:[#allocation2 + $0xb0] sm:$0xff] %vm278, %v268
        %302 = vst.msk [vmem:[#allocation2 + $0xb8] sm:$0xff] %vm278, %v269
        %303 = vst.msk [vmem:[#allocation2 + $0xc0] sm:$0xff] %vm278, %v270
        %304 = vst.msk [vmem:[#allocation2 + $0xc8] sm:$0xff] %vm278, %v271
        %305 = vst.msk [vmem:[#allocation2 + $0xd0] sm:$0xff] %vm278, %v272
        %306 = vst.msk [vmem:[#allocation2 + $0xd8] sm:$0xff] %vm278, %v273
        %307 = vst.msk [vmem:[#allocation2 + $0xe0] sm:$0xff] %vm278, %v274
        %308 = vst.msk [vmem:[#allocation2 + $0xe8] sm:$0xff] %vm278, %v275
        %309 = vst.msk [vmem:[#allocation2 + $0xf0] sm:$0xff] %vm278, %v276
        %310 = vst.msk [vmem:[#allocation2 + $0xf8] sm:$0xff] %vm278, %v277
        %v311 = vld [vmem:[%s211 + $0x1] sm:$0xff]
        %v312 = vld [vmem:[%s211 + $0x9] sm:$0xff]
        %v313 = vld [vmem:[%s211 + $0x19] sm:$0xff]
        %v314 = vld [vmem:[%s211 + $0x21] sm:$0xff]
        %v315 = vld [vmem:[%s211 + $0x31] sm:$0xff]
        %v316 = vld [vmem:[%s211 + $0x39] sm:$0xff]
        %v317 = vld [vmem:[%s211 + $0x49] sm:$0xff]
        %v318 = vld [vmem:[%s211 + $0x51] sm:$0xff]
        %v319 = vld [vmem:[%s211 + $0x61] sm:$0xff]
        %v320 = vld [vmem:[%s211 + $0x69] sm:$0xff]
        %v321 = vld [vmem:[%s211 + $0x79] sm:$0xff]
        %v322 = vld [vmem:[%s211 + $0x81] sm:$0xff]
        %v323 = vld [vmem:[%s211 + $0x91] sm:$0xff]
        %v324 = vld [vmem:[%s211 + $0x99] sm:$0xff]
        %v325 = vld [vmem:[%s211 + $0xa9] sm:$0xff]
        %v326 = vld [vmem:[%s211 + $0xb1] sm:$0xff]
        %v327 = vld [vmem:[%s211 + $0xc1] sm:$0xff]
        %v328 = vld [vmem:[%s211 + $0xc9] sm:$0xff]
        %v329 = vld [vmem:[%s211 + $0xd9] sm:$0xff]
        %v330 = vld [vmem:[%s211 + $0xe1] sm:$0xff]
        %v331 = vld [vmem:[%s211 + $0xf1] sm:$0xff]
        %v332 = vld [vmem:[%s211 + $0xf9] sm:$0xff]
        %v333 = vld [vmem:[%s211 + $0x109] sm:$0xff]
        %v334 = vld [vmem:[%s211 + $0x111] sm:$0xff]
        %v335 = vld [vmem:[%s211 + $0x121] sm:$0xff]
        %v336 = vld [vmem:[%s211 + $0x129] sm:$0xff]
        %v337 = vld [vmem:[%s211 + $0x139] sm:$0xff]
        %v338 = vld [vmem:[%s211 + $0x141] sm:$0xff]
        %v339 = vld [vmem:[%s211 + $0x151] sm:$0xff]
        %v340 = vld [vmem:[%s211 + $0x159] sm:$0xff]
        %v341 = vld [vmem:[%s211 + $0x169] sm:$0xff]
        %v342 = vld [vmem:[%s211 + $0x171] sm:$0xff]
        %375 = vrot.lane.b32.xlu0 %v311, 8
        %v376 = vpop.permute.xlu0 %375
        %377 = vrot.lane.b32.xlu0 %v312, 8
        %v378 = vpop.permute.xlu0 %377
        %379 = vrot.lane.b32.xlu0 %v313, 8
        %v380 = vpop.permute.xlu0 %379
        %381 = vrot.lane.b32.xlu0 %v314, 8
        %v382 = vpop.permute.xlu0 %381
        %383 = vrot.lane.b32.xlu0 %v315, 8
        %v384 = vpop.permute.xlu0 %383
        %385 = vrot.lane.b32.xlu0 %v316, 8
        %v386 = vpop.permute.xlu0 %385
        %387 = vrot.lane.b32.xlu0 %v317, 8
        %v388 = vpop.permute.xlu0 %387
        %389 = vrot.lane.b32.xlu0 %v318, 8
        %v390 = vpop.permute.xlu0 %389
        %391 = vrot.lane.b32.xlu0 %v319, 8
        %v392 = vpop.permute.xlu0 %391
        %393 = vrot.lane.b32.xlu0 %v320, 8
        %v394 = vpop.permute.xlu0 %393
        %395 = vrot.lane.b32.xlu0 %v321, 8
        %v396 = vpop.permute.xlu0 %395
        %397 = vrot.lane.b32.xlu0 %v322, 8
        %v398 = vpop.permute.xlu0 %397
        %399 = vrot.lane.b32.xlu0 %v323, 8
        %v400 = vpop.permute.xlu0 %399
        %401 = vrot.lane.b32.xlu0 %v324, 8
        %v402 = vpop.permute.xlu0 %401
        %403 = vrot.lane.b32.xlu0 %v325, 8
        %v404 = vpop.permute.xlu0 %403
        %405 = vrot.lane.b32.xlu0 %v326, 8
        %v406 = vpop.permute.xlu0 %405
        %407 = vrot.lane.b32.xlu0 %v327, 8
        %v408 = vpop.permute.xlu0 %407
        %409 = vrot.lane.b32.xlu0 %v328, 8
        %v410 = vpop.permute.xlu0 %409
        %411 = vrot.lane.b32.xlu0 %v329, 8
        %v412 = vpop.permute.xlu0 %411
        %413 = vrot.lane.b32.xlu0 %v330, 8
        %v414 = vpop.permute.xlu0 %413
        %415 = vrot.lane.b32.xlu0 %v331, 8
        %v416 = vpop.permute.xlu0 %415
        %417 = vrot.lane.b32.xlu0 %v332, 8
        %v418 = vpop.permute.xlu0 %417
        %419 = vrot.lane.b32.xlu0 %v333, 8
        %v420 = vpop.permute.xlu0 %419
        %421 = vrot.lane.b32.xlu0 %v334, 8
        %v422 = vpop.permute.xlu0 %421
        %423 = vrot.lane.b32.xlu0 %v335, 8
        %v424 = vpop.permute.xlu0 %423
        %425 = vrot.lane.b32.xlu0 %v336, 8
        %v426 = vpop.permute.xlu0 %425
        %427 = vrot.lane.b32.xlu0 %v337, 8
        %v428 = vpop.permute.xlu0 %427
        %429 = vrot.lane.b32.xlu0 %v338, 8
        %v430 = vpop.permute.xlu0 %429
        %431 = vrot.lane.b32.xlu0 %v339, 8
        %v432 = vpop.permute.xlu0 %431
        %433 = vrot.lane.b32.xlu0 %v340, 8
        %v434 = vpop.permute.xlu0 %433
        %435 = vrot.lane.b32.xlu0 %v341, 8
        %v436 = vpop.permute.xlu0 %435
        %437 = vrot.lane.b32.xlu0 %v342, 8
        %v438 = vpop.permute.xlu0 %437
        %vm471 = vcmask 130112
        %472 = vst.msk [vmem:[#allocation2] sm:$0xff] %vm471, %v376
        %473 = vst.msk [vmem:[#allocation2 + $0x8] sm:$0xff] %vm471, %v378
        %474 = vst.msk [vmem:[#allocation2 + $0x10] sm:$0xff] %vm471, %v380
        %475 = vst.msk [vmem:[#allocation2 + $0x18] sm:$0xff] %vm471, %v382
        %476 = vst.msk [vmem:[#allocation2 + $0x20] sm:$0xff] %vm471, %v384
        %477 = vst.msk [vmem:[#allocation2 + $0x28] sm:$0xff] %vm471, %v386
        %478 = vst.msk [vmem:[#allocation2 + $0x30] sm:$0xff] %vm471, %v388
        %479 = vst.msk [vmem:[#allocation2 + $0x38] sm:$0xff] %vm471, %v390
        %480 = vst.msk [vmem:[#allocation2 + $0x40] sm:$0xff] %vm471, %v392
        %481 = vst.msk [vmem:[#allocation2 + $0x48] sm:$0xff] %vm471, %v394
        %482 = vst.msk [vmem:[#allocation2 + $0x50] sm:$0xff] %vm471, %v396
        %483 = vst.msk [vmem:[#allocation2 + $0x58] sm:$0xff] %vm471, %v398
        %484 = vst.msk [vmem:[#allocation2 + $0x60] sm:$0xff] %vm471, %v400
        %485 = vst.msk [vmem:[#allocation2 + $0x68] sm:$0xff] %vm471, %v402
        %486 = vst.msk [vmem:[#allocation2 + $0x70] sm:$0xff] %vm471, %v404
        %487 = vst.msk [vmem:[#allocation2 + $0x78] sm:$0xff] %vm471, %v406
        %488 = vst.msk [vmem:[#allocation2 + $0x80] sm:$0xff] %vm471, %v408
        %489 = vst.msk [vmem:[#allocation2 + $0x88] sm:$0xff] %vm471, %v410
        %490 = vst.msk [vmem:[#allocation2 + $0x90] sm:$0xff] %vm471, %v412
        %491 = vst.msk [vmem:[#allocation2 + $0x98] sm:$0xff] %vm471, %v414
        %492 = vst.msk [vmem:[#allocation2 + $0xa0] sm:$0xff] %vm471, %v416
        %493 = vst.msk [vmem:[#allocation2 + $0xa8] sm:$0xff] %vm471, %v418
        %494 = vst.msk [vmem:[#allocation2 + $0xb0] sm:$0xff] %vm471, %v420
        %495 = vst.msk [vmem:[#allocation2 + $0xb8] sm:$0xff] %vm471, %v422
        %496 = vst.msk [vmem:[#allocation2 + $0xc0] sm:$0xff] %vm471, %v424
        %497 = vst.msk [vmem:[#allocation2 + $0xc8] sm:$0xff] %vm471, %v426
        %498 = vst.msk [vmem:[#allocation2 + $0xd0] sm:$0xff] %vm471, %v428
        %499 = vst.msk [vmem:[#allocation2 + $0xd8] sm:$0xff] %vm471, %v430
        %500 = vst.msk [vmem:[#allocation2 + $0xe0] sm:$0xff] %vm471, %v432
        %501 = vst.msk [vmem:[#allocation2 + $0xe8] sm:$0xff] %vm471, %v434
        %502 = vst.msk [vmem:[#allocation2 + $0xf0] sm:$0xff] %vm471, %v436
        %503 = vst.msk [vmem:[#allocation2 + $0xf8] sm:$0xff] %vm471, %v438
        %v504 = vld [vmem:[%s211 + $0x2] sm:$0xff]
        %v505 = vld [vmem:[%s211 + $0xa] sm:$0xff]
        %v506 = vld [vmem:[%s211 + $0x1a] sm:$0xff]
        %v507 = vld [vmem:[%s211 + $0x22] sm:$0xff]
        %v508 = vld [vmem:[%s211 + $0x32] sm:$0xff]
        %v509 = vld [vmem:[%s211 + $0x3a] sm:$0xff]
        %v510 = vld [vmem:[%s211 + $0x4a] sm:$0xff]
        %v511 = vld [vmem:[%s211 + $0x52] sm:$0xff]
        %v512 = vld [vmem:[%s211 + $0x62] sm:$0xff]
        %v513 = vld [vmem:[%s211 + $0x6a] sm:$0xff]
        %v514 = vld [vmem:[%s211 + $0x7a] sm:$0xff]
        %v515 = vld [vmem:[%s211 + $0x82] sm:$0xff]
        %v516 = vld [vmem:[%s211 + $0x92] sm:$0xff]
        %v517 = vld [vmem:[%s211 + $0x9a] sm:$0xff]
        %v518 = vld [vmem:[%s211 + $0xaa] sm:$0xff]
        %v519 = vld [vmem:[%s211 + $0xb2] sm:$0xff]
        %v520 = vld [vmem:[%s211 + $0xc2] sm:$0xff]
        %v521 = vld [vmem:[%s211 + $0xca] sm:$0xff]
        %v522 = vld [vmem:[%s211 + $0xda] sm:$0xff]
        %v523 = vld [vmem:[%s211 + $0xe2] sm:$0xff]
        %v524 = vld [vmem:[%s211 + $0xf2] sm:$0xff]
        %v525 = vld [vmem:[%s211 + $0xfa] sm:$0xff]
        %v526 = vld [vmem:[%s211 + $0x10a] sm:$0xff]
        %v527 = vld [vmem:[%s211 + $0x112] sm:$0xff]
        %v528 = vld [vmem:[%s211 + $0x122] sm:$0xff]
        %v529 = vld [vmem:[%s211 + $0x12a] sm:$0xff]
        %v530 = vld [vmem:[%s211 + $0x13a] sm:$0xff]
        %v531 = vld [vmem:[%s211 + $0x142] sm:$0xff]
        %v532 = vld [vmem:[%s211 + $0x152] sm:$0xff]
        %v533 = vld [vmem:[%s211 + $0x15a] sm:$0xff]
        %v534 = vld [vmem:[%s211 + $0x16a] sm:$0xff]
        %v535 = vld [vmem:[%s211 + $0x172] sm:$0xff]
        %568 = vrot.lane.b32.xlu0 %v504, 16
        %v569 = vpop.permute.xlu0 %568
        %570 = vrot.lane.b32.xlu0 %v505, 16
        %v571 = vpop.permute.xlu0 %570
        %572 = vrot.lane.b32.xlu0 %v506, 16
        %v573 = vpop.permute.xlu0 %572
        %574 = vrot.lane.b32.xlu0 %v507, 16
        %v575 = vpop.permute.xlu0 %574
        %576 = vrot.lane.b32.xlu0 %v508, 16
        %v577 = vpop.permute.xlu0 %576
        %578 = vrot.lane.b32.xlu0 %v509, 16
        %v579 = vpop.permute.xlu0 %578
        %580 = vrot.lane.b32.xlu0 %v510, 16
        %v581 = vpop.permute.xlu0 %580
        %582 = vrot.lane.b32.xlu0 %v511, 16
        %v583 = vpop.permute.xlu0 %582
        %584 = vrot.lane.b32.xlu0 %v512, 16
        %v585 = vpop.permute.xlu0 %584
        %586 = vrot.lane.b32.xlu0 %v513, 16
        %v587 = vpop.permute.xlu0 %586
        %588 = vrot.lane.b32.xlu0 %v514, 16
        %v589 = vpop.permute.xlu0 %588
        %590 = vrot.lane.b32.xlu0 %v515, 16
        %v591 = vpop.permute.xlu0 %590
        %592 = vrot.lane.b32.xlu0 %v516, 16
        %v593 = vpop.permute.xlu0 %592
        %594 = vrot.lane.b32.xlu0 %v517, 16
        %v595 = vpop.permute.xlu0 %594
        %596 = vrot.lane.b32.xlu0 %v518, 16
        %v597 = vpop.permute.xlu0 %596
        %598 = vrot.lane.b32.xlu0 %v519, 16
        %v599 = vpop.permute.xlu0 %598
        %600 = vrot.lane.b32.xlu0 %v520, 16
        %v601 = vpop.permute.xlu0 %600
        %602 = vrot.lane.b32.xlu0 %v521, 16
        %v603 = vpop.permute.xlu0 %602
        %604 = vrot.lane.b32.xlu0 %v522, 16
        %v605 = vpop.permute.xlu0 %604
        %606 = vrot.lane.b32.xlu0 %v523, 16
        %v607 = vpop.permute.xlu0 %606
        %608 = vrot.lane.b32.xlu0 %v524, 16
        %v609 = vpop.permute.xlu0 %608
        %610 = vrot.lane.b32.xlu0 %v525, 16
        %v611 = vpop.permute.xlu0 %610
        %612 = vrot.lane.b32.xlu0 %v526, 16
        %v613 = vpop.permute.xlu0 %612
        %614 = vrot.lane.b32.xlu0 %v527, 16
        %v615 = vpop.permute.xlu0 %614
        %616 = vrot.lane.b32.xlu0 %v528, 16
        %v617 = vpop.permute.xlu0 %616
        %618 = vrot.lane.b32.xlu0 %v529, 16
        %v619 = vpop.permute.xlu0 %618
        %620 = vrot.lane.b32.xlu0 %v530, 16
        %v621 = vpop.permute.xlu0 %620
        %622 = vrot.lane.b32.xlu0 %v531, 16
        %v623 = vpop.permute.xlu0 %622
        %624 = vrot.lane.b32.xlu0 %v532, 16
        %v625 = vpop.permute.xlu0 %624
        %626 = vrot.lane.b32.xlu0 %v533, 16
        %v627 = vpop.permute.xlu0 %626
        %628 = vrot.lane.b32.xlu0 %v534, 16
        %v629 = vpop.permute.xlu0 %628
        %630 = vrot.lane.b32.xlu0 %v535, 16
        %v631 = vpop.permute.xlu0 %630
        %vm664 = vcmask 195712
        %665 = vst.msk [vmem:[#allocation2] sm:$0xff] %vm664, %v569
        %666 = vst.msk [vmem:[#allocation2 + $0x8] sm:$0xff] %vm664, %v571
        %667 = vst.msk [vmem:[#allocation2 + $0x10] sm:$0xff] %vm664, %v573
        %668 = vst.msk [vmem:[#allocation2 + $0x18] sm:$0xff] %vm664, %v575
        %669 = vst.msk [vmem:[#allocation2 + $0x20] sm:$0xff] %vm664, %v577
        %670 = vst.msk [vmem:[#allocation2 + $0x28] sm:$0xff] %vm664, %v579
        %671 = vst.msk [vmem:[#allocation2 + $0x30] sm:$0xff] %vm664, %v581
        %672 = vst.msk [vmem:[#allocation2 + $0x38] sm:$0xff] %vm664, %v583
        %673 = vst.msk [vmem:[#allocation2 + $0x40] sm:$0xff] %vm664, %v585
        %674 = vst.msk [vmem:[#allocation2 + $0x48] sm:$0xff] %vm664, %v587
        %675 = vst.msk [vmem:[#allocation2 + $0x50] sm:$0xff] %vm664, %v589
        %676 = vst.msk [vmem:[#allocation2 + $0x58] sm:$0xff] %vm664, %v591
        %677 = vst.msk [vmem:[#allocation2 + $0x60] sm:$0xff] %vm664, %v593
        %678 = vst.msk [vmem:[#allocation2 + $0x68] sm:$0xff] %vm664, %v595
        %679 = vst.msk [vmem:[#allocation2 + $0x70] sm:$0xff] %vm664, %v597
        %680 = vst.msk [vmem:[#allocation2 + $0x78] sm:$0xff] %vm664, %v599
        %681 = vst.msk [vmem:[#allocation2 + $0x80] sm:$0xff] %vm664, %v601
        %682 = vst.msk [vmem:[#allocation2 + $0x88] sm:$0xff] %vm664, %v603
        %683 = vst.msk [vmem:[#allocation2 + $0x90] sm:$0xff] %vm664, %v605
        %684 = vst.msk [vmem:[#allocation2 + $0x98] sm:$0xff] %vm664, %v607
        %685 = vst.msk [vmem:[#allocation2 + $0xa0] sm:$0xff] %vm664, %v609
        %686 = vst.msk [vmem:[#allocation2 + $0xa8] sm:$0xff] %vm664, %v611
        %687 = vst.msk [vmem:[#allocation2 + $0xb0] sm:$0xff] %vm664, %v613
        %688 = vst.msk [vmem:[#allocation2 + $0xb8] sm:$0xff] %vm664, %v615
        %689 = vst.msk [vmem:[#allocation2 + $0xc0] sm:$0xff] %vm664, %v617
        %690 = vst.msk [vmem:[#allocation2 + $0xc8] sm:$0xff] %vm664, %v619
        %691 = vst.msk [vmem:[#allocation2 + $0xd0] sm:$0xff] %vm664, %v621
        %692 = vst.msk [vmem:[#allocation2 + $0xd8] sm:$0xff] %vm664, %v623
        %693 = vst.msk [vmem:[#allocation2 + $0xe0] sm:$0xff] %vm664, %v625
        %694 = vst.msk [vmem:[#allocation2 + $0xe8] sm:$0xff] %vm664, %v627
        %695 = vst.msk [vmem:[#allocation2 + $0xf0] sm:$0xff] %vm664, %v629
        %696 = vst.msk [vmem:[#allocation2 + $0xf8] sm:$0xff] %vm664, %v631
        %s697 = scalar_lea.vmem %s211, 24
        %v698 = vld [vmem:[%s697] sm:$0xff]
        %v699 = vld [vmem:[%s697 + $0x8] sm:$0xff]
        %v700 = vld [vmem:[%s697 + $0x18] sm:$0xff]
        %v701 = vld [vmem:[%s697 + $0x20] sm:$0xff]
        %v702 = vld [vmem:[%s697 + $0x30] sm:$0xff]
        %v703 = vld [vmem:[%s697 + $0x38] sm:$0xff]
        %v704 = vld [vmem:[%s697 + $0x48] sm:$0xff]
        %v705 = vld [vmem:[%s697 + $0x50] sm:$0xff]
        %v706 = vld [vmem:[%s697 + $0x60] sm:$0xff]
        %v707 = vld [vmem:[%s697 + $0x68] sm:$0xff]
        %v708 = vld [vmem:[%s697 + $0x78] sm:$0xff]
        %v709 = vld [vmem:[%s697 + $0x80] sm:$0xff]
        %v710 = vld [vmem:[%s697 + $0x90] sm:$0xff]
        %v711 = vld [vmem:[%s697 + $0x98] sm:$0xff]
        %v712 = vld [vmem:[%s697 + $0xa8] sm:$0xff]
        %v713 = vld [vmem:[%s697 + $0xb0] sm:$0xff]
        %v714 = vld [vmem:[%s697 + $0xc0] sm:$0xff]
        %v715 = vld [vmem:[%s697 + $0xc8] sm:$0xff]
        %v716 = vld [vmem:[%s697 + $0xd8] sm:$0xff]
        %v717 = vld [vmem:[%s697 + $0xe0] sm:$0xff]
        %v718 = vld [vmem:[%s697 + $0xf0] sm:$0xff]
        %v719 = vld [vmem:[%s697 + $0xf8] sm:$0xff]
        %v720 = vld [vmem:[%s697 + $0x108] sm:$0xff]
        %v721 = vld [vmem:[%s697 + $0x110] sm:$0xff]
        %v722 = vld [vmem:[%s697 + $0x120] sm:$0xff]
        %v723 = vld [vmem:[%s697 + $0x128] sm:$0xff]
        %v724 = vld [vmem:[%s697 + $0x138] sm:$0xff]
        %v725 = vld [vmem:[%s697 + $0x140] sm:$0xff]
        %v726 = vld [vmem:[%s697 + $0x150] sm:$0xff]
        %v727 = vld [vmem:[%s697 + $0x158] sm:$0xff]
        %v728 = vld [vmem:[%s697 + $0x168] sm:$0xff]
        %v729 = vld [vmem:[%s697 + $0x170] sm:$0xff]
        %762 = vrot.lane.b32.xlu0 %v698, 24
        %v763 = vpop.permute.xlu0 %762
        %764 = vrot.lane.b32.xlu0 %v699, 24
        %v765 = vpop.permute.xlu0 %764
        %766 = vrot.lane.b32.xlu0 %v700, 24
        %v767 = vpop.permute.xlu0 %766
        %768 = vrot.lane.b32.xlu0 %v701, 24
        %v769 = vpop.permute.xlu0 %768
        %770 = vrot.lane.b32.xlu0 %v702, 24
        %v771 = vpop.permute.xlu0 %770
        %772 = vrot.lane.b32.xlu0 %v703, 24
        %v773 = vpop.permute.xlu0 %772
        %774 = vrot.lane.b32.xlu0 %v704, 24
        %v775 = vpop.permute.xlu0 %774
        %776 = vrot.lane.b32.xlu0 %v705, 24
        %v777 = vpop.permute.xlu0 %776
        %778 = vrot.lane.b32.xlu0 %v706, 24
        %v779 = vpop.permute.xlu0 %778
        %780 = vrot.lane.b32.xlu0 %v707, 24
        %v781 = vpop.permute.xlu0 %780
        %782 = vrot.lane.b32.xlu0 %v708, 24
        %v783 = vpop.permute.xlu0 %782
        %784 = vrot.lane.b32.xlu0 %v709, 24
        %v785 = vpop.permute.xlu0 %784
        %786 = vrot.lane.b32.xlu0 %v710, 24
        %v787 = vpop.permute.xlu0 %786
        %788 = vrot.lane.b32.xlu0 %v711, 24
        %v789 = vpop.permute.xlu0 %788
        %790 = vrot.lane.b32.xlu0 %v712, 24
        %v791 = vpop.permute.xlu0 %790
        %792 = vrot.lane.b32.xlu0 %v713, 24
        %v793 = vpop.permute.xlu0 %792
        %794 = vrot.lane.b32.xlu0 %v714, 24
        %v795 = vpop.permute.xlu0 %794
        %796 = vrot.lane.b32.xlu0 %v715, 24
        %v797 = vpop.permute.xlu0 %796
        %798 = vrot.lane.b32.xlu0 %v716, 24
        %v799 = vpop.permute.xlu0 %798
        %800 = vrot.lane.b32.xlu0 %v717, 24
        %v801 = vpop.permute.xlu0 %800
        %802 = vrot.lane.b32.xlu0 %v718, 24
        %v803 = vpop.permute.xlu0 %802
        %804 = vrot.lane.b32.xlu0 %v719, 24
        %v805 = vpop.permute.xlu0 %804
        %806 = vrot.lane.b32.xlu0 %v720, 24
        %v807 = vpop.permute.xlu0 %806
        %808 = vrot.lane.b32.xlu0 %v721, 24
        %v809 = vpop.permute.xlu0 %808
        %810 = vrot.lane.b32.xlu0 %v722, 24
        %v811 = vpop.permute.xlu0 %810
        %812 = vrot.lane.b32.xlu0 %v723, 24
        %v813 = vpop.permute.xlu0 %812
        %814 = vrot.lane.b32.xlu0 %v724, 24
        %v815 = vpop.permute.xlu0 %814
        %816 = vrot.lane.b32.xlu0 %v725, 24
        %v817 = vpop.permute.xlu0 %816
        %818 = vrot.lane.b32.xlu0 %v726, 24
        %v819 = vpop.permute.xlu0 %818
        %820 = vrot.lane.b32.xlu0 %v727, 24
        %v821 = vpop.permute.xlu0 %820
        %822 = vrot.lane.b32.xlu0 %v728, 24
        %v823 = vpop.permute.xlu0 %822
        %824 = vrot.lane.b32.xlu0 %v729, 24
        %v825 = vpop.permute.xlu0 %824
        %vm858 = vcmask 261312
        %859 = vst.msk [vmem:[#allocation2] sm:$0xff] %vm858, %v763
        %860 = vst.msk [vmem:[#allocation2 + $0x8] sm:$0xff] %vm858, %v765
        %861 = vst.msk [vmem:[#allocation2 + $0x10] sm:$0xff] %vm858, %v767
        %862 = vst.msk [vmem:[#allocation2 + $0x18] sm:$0xff] %vm858, %v769
        %863 = vst.msk [vmem:[#allocation2 + $0x20] sm:$0xff] %vm858, %v771
        %864 = vst.msk [vmem:[#allocation2 + $0x28] sm:$0xff] %vm858, %v773
        %865 = vst.msk [vmem:[#allocation2 + $0x30] sm:$0xff] %vm858, %v775
        %866 = vst.msk [vmem:[#allocation2 + $0x38] sm:$0xff] %vm858, %v777
        %867 = vst.msk [vmem:[#allocation2 + $0x40] sm:$0xff] %vm858, %v779
        %868 = vst.msk [vmem:[#allocation2 + $0x48] sm:$0xff] %vm858, %v781
        %869 = vst.msk [vmem:[#allocation2 + $0x50] sm:$0xff] %vm858, %v783
        %870 = vst.msk [vmem:[#allocation2 + $0x58] sm:$0xff] %vm858, %v785
        %871 = vst.msk [vmem:[#allocation2 + $0x60] sm:$0xff] %vm858, %v787
        %872 = vst.msk [vmem:[#allocation2 + $0x68] sm:$0xff] %vm858, %v789
        %873 = vst.msk [vmem:[#allocation2 + $0x70] sm:$0xff] %vm858, %v791
        %874 = vst.msk [vmem:[#allocation2 + $0x78] sm:$0xff] %vm858, %v793
        %875 = vst.msk [vmem:[#allocation2 + $0x80] sm:$0xff] %vm858, %v795
        %876 = vst.msk [vmem:[#allocation2 + $0x88] sm:$0xff] %vm858, %v797
        %877 = vst.msk [vmem:[#allocation2 + $0x90] sm:$0xff] %vm858, %v799
        %878 = vst.msk [vmem:[#allocation2 + $0x98] sm:$0xff] %vm858, %v801
        %879 = vst.msk [vmem:[#allocation2 + $0xa0] sm:$0xff] %vm858, %v803
        %880 = vst.msk [vmem:[#allocation2 + $0xa8] sm:$0xff] %vm858, %v805
        %881 = vst.msk [vmem:[#allocation2 + $0xb0] sm:$0xff] %vm858, %v807
        %882 = vst.msk [vmem:[#allocation2 + $0xb8] sm:$0xff] %vm858, %v809
        %883 = vst.msk [vmem:[#allocation2 + $0xc0] sm:$0xff] %vm858, %v811
        %884 = vst.msk [vmem:[#allocation2 + $0xc8] sm:$0xff] %vm858, %v813
        %885 = vst.msk [vmem:[#allocation2 + $0xd0] sm:$0xff] %vm858, %v815
        %886 = vst.msk [vmem:[#allocation2 + $0xd8] sm:$0xff] %vm858, %v817
        %887 = vst.msk [vmem:[#allocation2 + $0xe0] sm:$0xff] %vm858, %v819
        %888 = vst.msk [vmem:[#allocation2 + $0xe8] sm:$0xff] %vm858, %v821
        %889 = vst.msk [vmem:[#allocation2 + $0xf0] sm:$0xff] %vm858, %v823
        %890 = vst.msk [vmem:[#allocation2 + $0xf8] sm:$0xff] %vm858, %v825
        %v891 = vld [vmem:[%s697 + $0x1] sm:$0xff]
        %v892 = vld [vmem:[%s697 + $0x9] sm:$0xff]
        %v893 = vld [vmem:[%s697 + $0x19] sm:$0xff]
        %v894 = vld [vmem:[%s697 + $0x21] sm:$0xff]
        %v895 = vld [vmem:[%s697 + $0x31] sm:$0xff]
        %v896 = vld [vmem:[%s697 + $0x39] sm:$0xff]
        %v897 = vld [vmem:[%s697 + $0x49] sm:$0xff]
        %v898 = vld [vmem:[%s697 + $0x51] sm:$0xff]
        %v899 = vld [vmem:[%s697 + $0x61] sm:$0xff]
        %v900 = vld [vmem:[%s697 + $0x69] sm:$0xff]
        %v901 = vld [vmem:[%s697 + $0x79] sm:$0xff]
        %v902 = vld [vmem:[%s697 + $0x81] sm:$0xff]
        %v903 = vld [vmem:[%s697 + $0x91] sm:$0xff]
        %v904 = vld [vmem:[%s697 + $0x99] sm:$0xff]
        %v905 = vld [vmem:[%s697 + $0xa9] sm:$0xff]
        %v906 = vld [vmem:[%s697 + $0xb1] sm:$0xff]
        %v907 = vld [vmem:[%s697 + $0xc1] sm:$0xff]
        %v908 = vld [vmem:[%s697 + $0xc9] sm:$0xff]
        %v909 = vld [vmem:[%s697 + $0xd9] sm:$0xff]
        %v910 = vld [vmem:[%s697 + $0xe1] sm:$0xff]
        %v911 = vld [vmem:[%s697 + $0xf1] sm:$0xff]
        %v912 = vld [vmem:[%s697 + $0xf9] sm:$0xff]
        %v913 = vld [vmem:[%s697 + $0x109] sm:$0xff]
        %v914 = vld [vmem:[%s697 + $0x111] sm:$0xff]
        %v915 = vld [vmem:[%s697 + $0x121] sm:$0xff]
        %v916 = vld [vmem:[%s697 + $0x129] sm:$0xff]
        %v917 = vld [vmem:[%s697 + $0x139] sm:$0xff]
        %v918 = vld [vmem:[%s697 + $0x141] sm:$0xff]
        %v919 = vld [vmem:[%s697 + $0x151] sm:$0xff]
        %v920 = vld [vmem:[%s697 + $0x159] sm:$0xff]
        %v921 = vld [vmem:[%s697 + $0x169] sm:$0xff]
        %v922 = vld [vmem:[%s697 + $0x171] sm:$0xff]
        %955 = vrot.lane.b32.xlu0 %v891, 32
        %v956 = vpop.permute.xlu0 %955
        %957 = vrot.lane.b32.xlu0 %v892, 32
        %v958 = vpop.permute.xlu0 %957
        %959 = vrot.lane.b32.xlu0 %v893, 32
        %v960 = vpop.permute.xlu0 %959
        %961 = vrot.lane.b32.xlu0 %v894, 32
        %v962 = vpop.permute.xlu0 %961
        %963 = vrot.lane.b32.xlu0 %v895, 32
        %v964 = vpop.permute.xlu0 %963
        %965 = vrot.lane.b32.xlu0 %v896, 32
        %v966 = vpop.permute.xlu0 %965
        %967 = vrot.lane.b32.xlu0 %v897, 32
        %v968 = vpop.permute.xlu0 %967
        %969 = vrot.lane.b32.xlu0 %v898, 32
        %v970 = vpop.permute.xlu0 %969
        %971 = vrot.lane.b32.xlu0 %v899, 32
        %v972 = vpop.permute.xlu0 %971
        %973 = vrot.lane.b32.xlu0 %v900, 32
        %v974 = vpop.permute.xlu0 %973
        %975 = vrot.lane.b32.xlu0 %v901, 32
        %v976 = vpop.permute.xlu0 %975
        %977 = vrot.lane.b32.xlu0 %v902, 32
        %v978 = vpop.permute.xlu0 %977
        %979 = vrot.lane.b32.xlu0 %v903, 32
        %v980 = vpop.permute.xlu0 %979
        %981 = vrot.lane.b32.xlu0 %v904, 32
        %v982 = vpop.permute.xlu0 %981
        %983 = vrot.lane.b32.xlu0 %v905, 32
        %v984 = vpop.permute.xlu0 %983
        %985 = vrot.lane.b32.xlu0 %v906, 32
        %v986 = vpop.permute.xlu0 %985
        %987 = vrot.lane.b32.xlu0 %v907, 32
        %v988 = vpop.permute.xlu0 %987
        %989 = vrot.lane.b32.xlu0 %v908, 32
        %v990 = vpop.permute.xlu0 %989
        %991 = vrot.lane.b32.xlu0 %v909, 32
        %v992 = vpop.permute.xlu0 %991
        %993 = vrot.lane.b32.xlu0 %v910, 32
        %v994 = vpop.permute.xlu0 %993
        %995 = vrot.lane.b32.xlu0 %v911, 32
        %v996 = vpop.permute.xlu0 %995
        %997 = vrot.lane.b32.xlu0 %v912, 32
        %v998 = vpop.permute.xlu0 %997
        %999 = vrot.lane.b32.xlu0 %v913, 32
        %v1000 = vpop.permute.xlu0 %999
        %1001 = vrot.lane.b32.xlu0 %v914, 32
        %v1002 = vpop.permute.xlu0 %1001
        %1003 = vrot.lane.b32.xlu0 %v915, 32
        %v1004 = vpop.permute.xlu0 %1003
        %1005 = vrot.lane.b32.xlu0 %v916, 32
        %v1006 = vpop.permute.xlu0 %1005
        %1007 = vrot.lane.b32.xlu0 %v917, 32
        %v1008 = vpop.permute.xlu0 %1007
        %1009 = vrot.lane.b32.xlu0 %v918, 32
        %v1010 = vpop.permute.xlu0 %1009
        %1011 = vrot.lane.b32.xlu0 %v919, 32
        %v1012 = vpop.permute.xlu0 %1011
        %1013 = vrot.lane.b32.xlu0 %v920, 32
        %v1014 = vpop.permute.xlu0 %1013
        %1015 = vrot.lane.b32.xlu0 %v921, 32
        %v1016 = vpop.permute.xlu0 %1015
        %1017 = vrot.lane.b32.xlu0 %v922, 32
        %v1018 = vpop.permute.xlu0 %1017
        %vm1051 = vcmask 326912
        %1052 = vst.msk [vmem:[#allocation2] sm:$0xff] %vm1051, %v956
        %1053 = vst.msk [vmem:[#allocation2 + $0x8] sm:$0xff] %vm1051, %v958
        %1054 = vst.msk [vmem:[#allocation2 + $0x10] sm:$0xff] %vm1051, %v960
        %1055 = vst.msk [vmem:[#allocation2 + $0x18] sm:$0xff] %vm1051, %v962
        %1056 = vst.msk [vmem:[#allocation2 + $0x20] sm:$0xff] %vm1051, %v964
        %1057 = vst.msk [vmem:[#allocation2 + $0x28] sm:$0xff] %vm1051, %v966
        %1058 = vst.msk [vmem:[#allocation2 + $0x30] sm:$0xff] %vm1051, %v968
        %1059 = vst.msk [vmem:[#allocation2 + $0x38] sm:$0xff] %vm1051, %v970
        %1060 = vst.msk [vmem:[#allocation2 + $0x40] sm:$0xff] %vm1051, %v972
        %1061 = vst.msk [vmem:[#allocation2 + $0x48] sm:$0xff] %vm1051, %v974
        %1062 = vst.msk [vmem:[#allocation2 + $0x50] sm:$0xff] %vm1051, %v976
        %1063 = vst.msk [vmem:[#allocation2 + $0x58] sm:$0xff] %vm1051, %v978
        %1064 = vst.msk [vmem:[#allocation2 + $0x60] sm:$0xff] %vm1051, %v980
        %1065 = vst.msk [vmem:[#allocation2 + $0x68] sm:$0xff] %vm1051, %v982
        %1066 = vst.msk [vmem:[#allocation2 + $0x70] sm:$0xff] %vm1051, %v984
        %1067 = vst.msk [vmem:[#allocation2 + $0x78] sm:$0xff] %vm1051, %v986
        %1068 = vst.msk [vmem:[#allocation2 + $0x80] sm:$0xff] %vm1051, %v988
        %1069 = vst.msk [vmem:[#allocation2 + $0x88] sm:$0xff] %vm1051, %v990
        %1070 = vst.msk [vmem:[#allocation2 + $0x90] sm:$0xff] %vm1051, %v992
        %1071 = vst.msk [vmem:[#allocation2 + $0x98] sm:$0xff] %vm1051, %v994
        %1072 = vst.msk [vmem:[#allocation2 + $0xa0] sm:$0xff] %vm1051, %v996
        %1073 = vst.msk [vmem:[#allocation2 + $0xa8] sm:$0xff] %vm1051, %v998
        %1074 = vst.msk [vmem:[#allocation2 + $0xb0] sm:$0xff] %vm1051, %v1000
        %1075 = vst.msk [vmem:[#allocation2 + $0xb8] sm:$0xff] %vm1051, %v1002
        %1076 = vst.msk [vmem:[#allocation2 + $0xc0] sm:$0xff] %vm1051, %v1004
        %1077 = vst.msk [vmem:[#allocation2 + $0xc8] sm:$0xff] %vm1051, %v1006
        %1078 = vst.msk [vmem:[#allocation2 + $0xd0] sm:$0xff] %vm1051, %v1008
        %1079 = vst.msk [vmem:[#allocation2 + $0xd8] sm:$0xff] %vm1051, %v1010
        %1080 = vst.msk [vmem:[#allocation2 + $0xe0] sm:$0xff] %vm1051, %v1012
        %1081 = vst.msk [vmem:[#allocation2 + $0xe8] sm:$0xff] %vm1051, %v1014
        %1082 = vst.msk [vmem:[#allocation2 + $0xf0] sm:$0xff] %vm1051, %v1016
        %1083 = vst.msk [vmem:[#allocation2 + $0xf8] sm:$0xff] %vm1051, %v1018
        %v1084 = vld [vmem:[%s697 + $0x2] sm:$0xff]
        %v1085 = vld [vmem:[%s697 + $0xa] sm:$0xff]
        %v1086 = vld [vmem:[%s697 + $0x1a] sm:$0xff]
        %v1087 = vld [vmem:[%s697 + $0x22] sm:$0xff]
        %v1088 = vld [vmem:[%s697 + $0x32] sm:$0xff]
        %v1089 = vld [vmem:[%s697 + $0x3a] sm:$0xff]
        %v1090 = vld [vmem:[%s697 + $0x4a] sm:$0xff]
        %v1091 = vld [vmem:[%s697 + $0x52] sm:$0xff]
        %v1092 = vld [vmem:[%s697 + $0x62] sm:$0xff]
        %v1093 = vld [vmem:[%s697 + $0x6a] sm:$0xff]
        %v1094 = vld [vmem:[%s697 + $0x7a] sm:$0xff]
        %v1095 = vld [vmem:[%s697 + $0x82] sm:$0xff]
        %v1096 = vld [vmem:[%s697 + $0x92] sm:$0xff]
        %v1097 = vld [vmem:[%s697 + $0x9a] sm:$0xff]
        %v1098 = vld [vmem:[%s697 + $0xaa] sm:$0xff]
        %v1099 = vld [vmem:[%s697 + $0xb2] sm:$0xff]
        %v1100 = vld [vmem:[%s697 + $0xc2] sm:$0xff]
        %v1101 = vld [vmem:[%s697 + $0xca] sm:$0xff]
        %v1102 = vld [vmem:[%s697 + $0xda] sm:$0xff]
        %v1103 = vld [vmem:[%s697 + $0xe2] sm:$0xff]
        %v1104 = vld [vmem:[%s697 + $0xf2] sm:$0xff]
        %v1105 = vld [vmem:[%s697 + $0xfa] sm:$0xff]
        %v1106 = vld [vmem:[%s697 + $0x10a] sm:$0xff]
        %v1107 = vld [vmem:[%s697 + $0x112] sm:$0xff]
        %v1108 = vld [vmem:[%s697 + $0x122] sm:$0xff]
        %v1109 = vld [vmem:[%s697 + $0x12a] sm:$0xff]
        %v1110 = vld [vmem:[%s697 + $0x13a] sm:$0xff]
        %v1111 = vld [vmem:[%s697 + $0x142] sm:$0xff]
        %v1112 = vld [vmem:[%s697 + $0x152] sm:$0xff]
        %v1113 = vld [vmem:[%s697 + $0x15a] sm:$0xff]
        %v1114 = vld [vmem:[%s697 + $0x16a] sm:$0xff]
        %v1115 = vld [vmem:[%s697 + $0x172] sm:$0xff]
        %1148 = vrot.lane.b32.xlu0 %v1084, 40
        %v1149 = vpop.permute.xlu0 %1148
        %1150 = vrot.lane.b32.xlu0 %v1085, 40
        %v1151 = vpop.permute.xlu0 %1150
        %1152 = vrot.lane.b32.xlu0 %v1086, 40
        %v1153 = vpop.permute.xlu0 %1152
        %1154 = vrot.lane.b32.xlu0 %v1087, 40
        %v1155 = vpop.permute.xlu0 %1154
        %1156 = vrot.lane.b32.xlu0 %v1088, 40
        %v1157 = vpop.permute.xlu0 %1156
        %1158 = vrot.lane.b32.xlu0 %v1089, 40
        %v1159 = vpop.permute.xlu0 %1158
        %1160 = vrot.lane.b32.xlu0 %v1090, 40
        %v1161 = vpop.permute.xlu0 %1160
        %1162 = vrot.lane.b32.xlu0 %v1091, 40
        %v1163 = vpop.permute.xlu0 %1162
        %1164 = vrot.lane.b32.xlu0 %v1092, 40
        %v1165 = vpop.permute.xlu0 %1164
        %1166 = vrot.lane.b32.xlu0 %v1093, 40
        %v1167 = vpop.permute.xlu0 %1166
        %1168 = vrot.lane.b32.xlu0 %v1094, 40
        %v1169 = vpop.permute.xlu0 %1168
        %1170 = vrot.lane.b32.xlu0 %v1095, 40
        %v1171 = vpop.permute.xlu0 %1170
        %1172 = vrot.lane.b32.xlu0 %v1096, 40
        %v1173 = vpop.permute.xlu0 %1172
        %1174 = vrot.lane.b32.xlu0 %v1097, 40
        %v1175 = vpop.permute.xlu0 %1174
        %1176 = vrot.lane.b32.xlu0 %v1098, 40
        %v1177 = vpop.permute.xlu0 %1176
        %1178 = vrot.lane.b32.xlu0 %v1099, 40
        %v1179 = vpop.permute.xlu0 %1178
        %1180 = vrot.lane.b32.xlu0 %v1100, 40
        %v1181 = vpop.permute.xlu0 %1180
        %1182 = vrot.lane.b32.xlu0 %v1101, 40
        %v1183 = vpop.permute.xlu0 %1182
        %1184 = vrot.lane.b32.xlu0 %v1102, 40
        %v1185 = vpop.permute.xlu0 %1184
        %1186 = vrot.lane.b32.xlu0 %v1103, 40
        %v1187 = vpop.permute.xlu0 %1186
        %1188 = vrot.lane.b32.xlu0 %v1104, 40
        %v1189 = vpop.permute.xlu0 %1188
        %1190 = vrot.lane.b32.xlu0 %v1105, 40
        %v1191 = vpop.permute.xlu0 %1190
        %1192 = vrot.lane.b32.xlu0 %v1106, 40
        %v1193 = vpop.permute.xlu0 %1192
        %1194 = vrot.lane.b32.xlu0 %v1107, 40
        %v1195 = vpop.permute.xlu0 %1194
        %1196 = vrot.lane.b32.xlu0 %v1108, 40
        %v1197 = vpop.permute.xlu0 %1196
        %1198 = vrot.lane.b32.xlu0 %v1109, 40
        %v1199 = vpop.permute.xlu0 %1198
        %1200 = vrot.lane.b32.xlu0 %v1110, 40
        %v1201 = vpop.permute.xlu0 %1200
        %1202 = vrot.lane.b32.xlu0 %v1111, 40
        %v1203 = vpop.permute.xlu0 %1202
        %1204 = vrot.lane.b32.xlu0 %v1112, 40
        %v1205 = vpop.permute.xlu0 %1204
        %1206 = vrot.lane.b32.xlu0 %v1113, 40
        %v1207 = vpop.permute.xlu0 %1206
        %1208 = vrot.lane.b32.xlu0 %v1114, 40
        %v1209 = vpop.permute.xlu0 %1208
        %1210 = vrot.lane.b32.xlu0 %v1115, 40
        %v1211 = vpop.permute.xlu0 %1210
        %vm1244 = vcmask 392512
        %1245 = vst.msk [vmem:[#allocation2] sm:$0xff] %vm1244, %v1149
        %1246 = vst.msk [vmem:[#allocation2 + $0x8] sm:$0xff] %vm1244, %v1151
        %1247 = vst.msk [vmem:[#allocation2 + $0x10] sm:$0xff] %vm1244, %v1153
        %1248 = vst.msk [vmem:[#allocation2 + $0x18] sm:$0xff] %vm1244, %v1155
        %1249 = vst.msk [vmem:[#allocation2 + $0x20] sm:$0xff] %vm1244, %v1157
        %1250 = vst.msk [vmem:[#allocation2 + $0x28] sm:$0xff] %vm1244, %v1159
        %1251 = vst.msk [vmem:[#allocation2 + $0x30] sm:$0xff] %vm1244, %v1161
        %1252 = vst.msk [vmem:[#allocation2 + $0x38] sm:$0xff] %vm1244, %v1163
        %1253 = vst.msk [vmem:[#allocation2 + $0x40] sm:$0xff] %vm1244, %v1165
        %1254 = vst.msk [vmem:[#allocation2 + $0x48] sm:$0xff] %vm1244, %v1167
        %1255 = vst.msk [vmem:[#allocation2 + $0x50] sm:$0xff] %vm1244, %v1169
        %1256 = vst.msk [vmem:[#allocation2 + $0x58] sm:$0xff] %vm1244, %v1171
        %1257 = vst.msk [vmem:[#allocation2 + $0x60] sm:$0xff] %vm1244, %v1173
        %1258 = vst.msk [vmem:[#allocation2 + $0x68] sm:$0xff] %vm1244, %v1175
        %1259 = vst.msk [vmem:[#allocation2 + $0x70] sm:$0xff] %vm1244, %v1177
        %1260 = vst.msk [vmem:[#allocation2 + $0x78] sm:$0xff] %vm1244, %v1179
        %1261 = vst.msk [vmem:[#allocation2 + $0x80] sm:$0xff] %vm1244, %v1181
        %1262 = vst.msk [vmem:[#allocation2 + $0x88] sm:$0xff] %vm1244, %v1183
        %1263 = vst.msk [vmem:[#allocation2 + $0x90] sm:$0xff] %vm1244, %v1185
        %1264 = vst.msk [vmem:[#allocation2 + $0x98] sm:$0xff] %vm1244, %v1187
        %1265 = vst.msk [vmem:[#allocation2 + $0xa0] sm:$0xff] %vm1244, %v1189
        %1266 = vst.msk [vmem:[#allocation2 + $0xa8] sm:$0xff] %vm1244, %v1191
        %1267 = vst.msk [vmem:[#allocation2 + $0xb0] sm:$0xff] %vm1244, %v1193
        %1268 = vst.msk [vmem:[#allocation2 + $0xb8] sm:$0xff] %vm1244, %v1195
        %1269 = vst.msk [vmem:[#allocation2 + $0xc0] sm:$0xff] %vm1244, %v1197
        %1270 = vst.msk [vmem:[#allocation2 + $0xc8] sm:$0xff] %vm1244, %v1199
        %1271 = vst.msk [vmem:[#allocation2 + $0xd0] sm:$0xff] %vm1244, %v1201
        %1272 = vst.msk [vmem:[#allocation2 + $0xd8] sm:$0xff] %vm1244, %v1203
        %1273 = vst.msk [vmem:[#allocation2 + $0xe0] sm:$0xff] %vm1244, %v1205
        %1274 = vst.msk [vmem:[#allocation2 + $0xe8] sm:$0xff] %vm1244, %v1207
        %1275 = vst.msk [vmem:[#allocation2 + $0xf0] sm:$0xff] %vm1244, %v1209
        %1276 = vst.msk [vmem:[#allocation2 + $0xf8] sm:$0xff] %vm1244, %v1211
        %s1277 = scalar_lea.vmem %s211, 48
        %v1278 = vld [vmem:[%s1277] sm:$0xff]
        %v1279 = vld [vmem:[%s1277 + $0x8] sm:$0xff]
        %v1280 = vld [vmem:[%s1277 + $0x18] sm:$0xff]
        %v1281 = vld [vmem:[%s1277 + $0x20] sm:$0xff]
        %v1282 = vld [vmem:[%s1277 + $0x30] sm:$0xff]
        %v1283 = vld [vmem:[%s1277 + $0x38] sm:$0xff]
        %v1284 = vld [vmem:[%s1277 + $0x48] sm:$0xff]
        %v1285 = vld [vmem:[%s1277 + $0x50] sm:$0xff]
        %v1286 = vld [vmem:[%s1277 + $0x60] sm:$0xff]
        %v1287 = vld [vmem:[%s1277 + $0x68] sm:$0xff]
        %v1288 = vld [vmem:[%s1277 + $0x78] sm:$0xff]
        %v1289 = vld [vmem:[%s1277 + $0x80] sm:$0xff]
        %v1290 = vld [vmem:[%s1277 + $0x90] sm:$0xff]
        %v1291 = vld [vmem:[%s1277 + $0x98] sm:$0xff]
        %v1292 = vld [vmem:[%s1277 + $0xa8] sm:$0xff]
        %v1293 = vld [vmem:[%s1277 + $0xb0] sm:$0xff]
        %v1294 = vld [vmem:[%s1277 + $0xc0] sm:$0xff]
        %v1295 = vld [vmem:[%s1277 + $0xc8] sm:$0xff]
        %v1296 = vld [vmem:[%s1277 + $0xd8] sm:$0xff]
        %v1297 = vld [vmem:[%s1277 + $0xe0] sm:$0xff]
        %v1298 = vld [vmem:[%s1277 + $0xf0] sm:$0xff]
        %v1299 = vld [vmem:[%s1277 + $0xf8] sm:$0xff]
        %v1300 = vld [vmem:[%s1277 + $0x108] sm:$0xff]
        %v1301 = vld [vmem:[%s1277 + $0x110] sm:$0xff]
        %v1302 = vld [vmem:[%s1277 + $0x120] sm:$0xff]
        %v1303 = vld [vmem:[%s1277 + $0x128] sm:$0xff]
        %v1304 = vld [vmem:[%s1277 + $0x138] sm:$0xff]
        %v1305 = vld [vmem:[%s1277 + $0x140] sm:$0xff]
        %v1306 = vld [vmem:[%s1277 + $0x150] sm:$0xff]
        %v1307 = vld [vmem:[%s1277 + $0x158] sm:$0xff]
        %v1308 = vld [vmem:[%s1277 + $0x168] sm:$0xff]
        %v1309 = vld [vmem:[%s1277 + $0x170] sm:$0xff]
        %1342 = vrot.lane.b32.xlu0 %v1278, 48
        %v1343 = vpop.permute.xlu0 %1342
        %1344 = vrot.lane.b32.xlu0 %v1279, 48
        %v1345 = vpop.permute.xlu0 %1344
        %1346 = vrot.lane.b32.xlu0 %v1280, 48
        %v1347 = vpop.permute.xlu0 %1346
        %1348 = vrot.lane.b32.xlu0 %v1281, 48
        %v1349 = vpop.permute.xlu0 %1348
        %1350 = vrot.lane.b32.xlu0 %v1282, 48
        %v1351 = vpop.permute.xlu0 %1350
        %1352 = vrot.lane.b32.xlu0 %v1283, 48
        %v1353 = vpop.permute.xlu0 %1352
        %1354 = vrot.lane.b32.xlu0 %v1284, 48
        %v1355 = vpop.permute.xlu0 %1354
        %1356 = vrot.lane.b32.xlu0 %v1285, 48
        %v1357 = vpop.permute.xlu0 %1356
        %1358 = vrot.lane.b32.xlu0 %v1286, 48
        %v1359 = vpop.permute.xlu0 %1358
        %1360 = vrot.lane.b32.xlu0 %v1287, 48
        %v1361 = vpop.permute.xlu0 %1360
        %1362 = vrot.lane.b32.xlu0 %v1288, 48
        %v1363 = vpop.permute.xlu0 %1362
        %1364 = vrot.lane.b32.xlu0 %v1289, 48
        %v1365 = vpop.permute.xlu0 %1364
        %1366 = vrot.lane.b32.xlu0 %v1290, 48
        %v1367 = vpop.permute.xlu0 %1366
        %1368 = vrot.lane.b32.xlu0 %v1291, 48
        %v1369 = vpop.permute.xlu0 %1368
        %1370 = vrot.lane.b32.xlu0 %v1292, 48
        %v1371 = vpop.permute.xlu0 %1370
        %1372 = vrot.lane.b32.xlu0 %v1293, 48
        %v1373 = vpop.permute.xlu0 %1372
        %1374 = vrot.lane.b32.xlu0 %v1294, 48
        %v1375 = vpop.permute.xlu0 %1374
        %1376 = vrot.lane.b32.xlu0 %v1295, 48
        %v1377 = vpop.permute.xlu0 %1376
        %1378 = vrot.lane.b32.xlu0 %v1296, 48
        %v1379 = vpop.permute.xlu0 %1378
        %1380 = vrot.lane.b32.xlu0 %v1297, 48
        %v1381 = vpop.permute.xlu0 %1380
        %1382 = vrot.lane.b32.xlu0 %v1298, 48
        %v1383 = vpop.permute.xlu0 %1382
        %1384 = vrot.lane.b32.xlu0 %v1299, 48
        %v1385 = vpop.permute.xlu0 %1384
        %1386 = vrot.lane.b32.xlu0 %v1300, 48
        %v1387 = vpop.permute.xlu0 %1386
        %1388 = vrot.lane.b32.xlu0 %v1301, 48
        %v1389 = vpop.permute.xlu0 %1388
        %1390 = vrot.lane.b32.xlu0 %v1302, 48
        %v1391 = vpop.permute.xlu0 %1390
        %1392 = vrot.lane.b32.xlu0 %v1303, 48
        %v1393 = vpop.permute.xlu0 %1392
        %1394 = vrot.lane.b32.xlu0 %v1304, 48
        %v1395 = vpop.permute.xlu0 %1394
        %1396 = vrot.lane.b32.xlu0 %v1305, 48
        %v1397 = vpop.permute.xlu0 %1396
        %1398 = vrot.lane.b32.xlu0 %v1306, 48
        %v1399 = vpop.permute.xlu0 %1398
        %1400 = vrot.lane.b32.xlu0 %v1307, 48
        %v1401 = vpop.permute.xlu0 %1400
        %1402 = vrot.lane.b32.xlu0 %v1308, 48
        %v1403 = vpop.permute.xlu0 %1402
        %1404 = vrot.lane.b32.xlu0 %v1309, 48
        %v1405 = vpop.permute.xlu0 %1404
        %vm1438 = vcmask 458112
        %1439 = vst.msk [vmem:[#allocation2] sm:$0xff] %vm1438, %v1343
        %1440 = vst.msk [vmem:[#allocation2 + $0x8] sm:$0xff] %vm1438, %v1345
        %1441 = vst.msk [vmem:[#allocation2 + $0x10] sm:$0xff] %vm1438, %v1347
        %1442 = vst.msk [vmem:[#allocation2 + $0x18] sm:$0xff] %vm1438, %v1349
        %1443 = vst.msk [vmem:[#allocation2 + $0x20] sm:$0xff] %vm1438, %v1351
        %1444 = vst.msk [vmem:[#allocation2 + $0x28] sm:$0xff] %vm1438, %v1353
        %1445 = vst.msk [vmem:[#allocation2 + $0x30] sm:$0xff] %vm1438, %v1355
        %1446 = vst.msk [vmem:[#allocation2 + $0x38] sm:$0xff] %vm1438, %v1357
        %1447 = vst.msk [vmem:[#allocation2 + $0x40] sm:$0xff] %vm1438, %v1359
        %1448 = vst.msk [vmem:[#allocation2 + $0x48] sm:$0xff] %vm1438, %v1361
        %1449 = vst.msk [vmem:[#allocation2 + $0x50] sm:$0xff] %vm1438, %v1363
        %1450 = vst.msk [vmem:[#allocation2 + $0x58] sm:$0xff] %vm1438, %v1365
        %1451 = vst.msk [vmem:[#allocation2 + $0x60] sm:$0xff] %vm1438, %v1367
        %1452 = vst.msk [vmem:[#allocation2 + $0x68] sm:$0xff] %vm1438, %v1369
        %1453 = vst.msk [vmem:[#allocation2 + $0x70] sm:$0xff] %vm1438, %v1371
        %1454 = vst.msk [vmem:[#allocation2 + $0x78] sm:$0xff] %vm1438, %v1373
        %1455 = vst.msk [vmem:[#allocation2 + $0x80] sm:$0xff] %vm1438, %v1375
        %1456 = vst.msk [vmem:[#allocation2 + $0x88] sm:$0xff] %vm1438, %v1377
        %1457 = vst.msk [vmem:[#allocation2 + $0x90] sm:$0xff] %vm1438, %v1379
        %1458 = vst.msk [vmem:[#allocation2 + $0x98] sm:$0xff] %vm1438, %v1381
        %1459 = vst.msk [vmem:[#allocation2 + $0xa0] sm:$0xff] %vm1438, %v1383
        %1460 = vst.msk [vmem:[#allocation2 + $0xa8] sm:$0xff] %vm1438, %v1385
        %1461 = vst.msk [vmem:[#allocation2 + $0xb0] sm:$0xff] %vm1438, %v1387
        %1462 = vst.msk [vmem:[#allocation2 + $0xb8] sm:$0xff] %vm1438, %v1389
        %1463 = vst.msk [vmem:[#allocation2 + $0xc0] sm:$0xff] %vm1438, %v1391
        %1464 = vst.msk [vmem:[#allocation2 + $0xc8] sm:$0xff] %vm1438, %v1393
        %1465 = vst.msk [vmem:[#allocation2 + $0xd0] sm:$0xff] %vm1438, %v1395
        %1466 = vst.msk [vmem:[#allocation2 + $0xd8] sm:$0xff] %vm1438, %v1397
        %1467 = vst.msk [vmem:[#allocation2 + $0xe0] sm:$0xff] %vm1438, %v1399
        %1468 = vst.msk [vmem:[#allocation2 + $0xe8] sm:$0xff] %vm1438, %v1401
        %1469 = vst.msk [vmem:[#allocation2 + $0xf0] sm:$0xff] %vm1438, %v1403
        %1470 = vst.msk [vmem:[#allocation2 + $0xf8] sm:$0xff] %vm1438, %v1405
        %v1471 = vld [vmem:[%s1277 + $0x1] sm:$0xff]
        %v1472 = vld [vmem:[%s1277 + $0x9] sm:$0xff]
        %v1473 = vld [vmem:[%s1277 + $0x19] sm:$0xff]
        %v1474 = vld [vmem:[%s1277 + $0x21] sm:$0xff]
        %v1475 = vld [vmem:[%s1277 + $0x31] sm:$0xff]
        %v1476 = vld [vmem:[%s1277 + $0x39] sm:$0xff]
        %v1477 = vld [vmem:[%s1277 + $0x49] sm:$0xff]
        %v1478 = vld [vmem:[%s1277 + $0x51] sm:$0xff]
        %v1479 = vld [vmem:[%s1277 + $0x61] sm:$0xff]
        %v1480 = vld [vmem:[%s1277 + $0x69] sm:$0xff]
        %v1481 = vld [vmem:[%s1277 + $0x79] sm:$0xff]
        %v1482 = vld [vmem:[%s1277 + $0x81] sm:$0xff]
        %v1483 = vld [vmem:[%s1277 + $0x91] sm:$0xff]
        %v1484 = vld [vmem:[%s1277 + $0x99] sm:$0xff]
        %v1485 = vld [vmem:[%s1277 + $0xa9] sm:$0xff]
        %v1486 = vld [vmem:[%s1277 + $0xb1] sm:$0xff]
        %v1487 = vld [vmem:[%s1277 + $0xc1] sm:$0xff]
        %v1488 = vld [vmem:[%s1277 + $0xc9] sm:$0xff]
        %v1489 = vld [vmem:[%s1277 + $0xd9] sm:$0xff]
        %v1490 = vld [vmem:[%s1277 + $0xe1] sm:$0xff]
        %v1491 = vld [vmem:[%s1277 + $0xf1] sm:$0xff]
        %v1492 = vld [vmem:[%s1277 + $0xf9] sm:$0xff]
        %v1493 = vld [vmem:[%s1277 + $0x109] sm:$0xff]
        %v1494 = vld [vmem:[%s1277 + $0x111] sm:$0xff]
        %v1495 = vld [vmem:[%s1277 + $0x121] sm:$0xff]
        %v1496 = vld [vmem:[%s1277 + $0x129] sm:$0xff]
        %v1497 = vld [vmem:[%s1277 + $0x139] sm:$0xff]
        %v1498 = vld [vmem:[%s1277 + $0x141] sm:$0xff]
        %v1499 = vld [vmem:[%s1277 + $0x151] sm:$0xff]
        %v1500 = vld [vmem:[%s1277 + $0x159] sm:$0xff]
        %v1501 = vld [vmem:[%s1277 + $0x169] sm:$0xff]
        %v1502 = vld [vmem:[%s1277 + $0x171] sm:$0xff]
        %1535 = vrot.lane.b32.xlu0 %v1471, 56
        %v1536 = vpop.permute.xlu0 %1535
        %1537 = vrot.lane.b32.xlu0 %v1472, 56
        %v1538 = vpop.permute.xlu0 %1537
        %1539 = vrot.lane.b32.xlu0 %v1473, 56
        %v1540 = vpop.permute.xlu0 %1539
        %1541 = vrot.lane.b32.xlu0 %v1474, 56
        %v1542 = vpop.permute.xlu0 %1541
        %1543 = vrot.lane.b32.xlu0 %v1475, 56
        %v1544 = vpop.permute.xlu0 %1543
        %1545 = vrot.lane.b32.xlu0 %v1476, 56
        %v1546 = vpop.permute.xlu0 %1545
        %1547 = vrot.lane.b32.xlu0 %v1477, 56
        %v1548 = vpop.permute.xlu0 %1547
        %1549 = vrot.lane.b32.xlu0 %v1478, 56
        %v1550 = vpop.permute.xlu0 %1549
        %1551 = vrot.lane.b32.xlu0 %v1479, 56
        %v1552 = vpop.permute.xlu0 %1551
        %1553 = vrot.lane.b32.xlu0 %v1480, 56
        %v1554 = vpop.permute.xlu0 %1553
        %1555 = vrot.lane.b32.xlu0 %v1481, 56
        %v1556 = vpop.permute.xlu0 %1555
        %1557 = vrot.lane.b32.xlu0 %v1482, 56
        %v1558 = vpop.permute.xlu0 %1557
        %1559 = vrot.lane.b32.xlu0 %v1483, 56
        %v1560 = vpop.permute.xlu0 %1559
        %1561 = vrot.lane.b32.xlu0 %v1484, 56
        %v1562 = vpop.permute.xlu0 %1561
        %1563 = vrot.lane.b32.xlu0 %v1485, 56
        %v1564 = vpop.permute.xlu0 %1563
        %1565 = vrot.lane.b32.xlu0 %v1486, 56
        %v1566 = vpop.permute.xlu0 %1565
        %1567 = vrot.lane.b32.xlu0 %v1487, 56
        %v1568 = vpop.permute.xlu0 %1567
        %1569 = vrot.lane.b32.xlu0 %v1488, 56
        %v1570 = vpop.permute.xlu0 %1569
        %1571 = vrot.lane.b32.xlu0 %v1489, 56
        %v1572 = vpop.permute.xlu0 %1571
        %1573 = vrot.lane.b32.xlu0 %v1490, 56
        %v1574 = vpop.permute.xlu0 %1573
        %1575 = vrot.lane.b32.xlu0 %v1491, 56
        %v1576 = vpop.permute.xlu0 %1575
        %1577 = vrot.lane.b32.xlu0 %v1492, 56
        %v1578 = vpop.permute.xlu0 %1577
        %1579 = vrot.lane.b32.xlu0 %v1493, 56
        %v1580 = vpop.permute.xlu0 %1579
        %1581 = vrot.lane.b32.xlu0 %v1494, 56
        %v1582 = vpop.permute.xlu0 %1581
        %1583 = vrot.lane.b32.xlu0 %v1495, 56
        %v1584 = vpop.permute.xlu0 %1583
        %1585 = vrot.lane.b32.xlu0 %v1496, 56
        %v1586 = vpop.permute.xlu0 %1585
        %1587 = vrot.lane.b32.xlu0 %v1497, 56
        %v1588 = vpop.permute.xlu0 %1587
        %1589 = vrot.lane.b32.xlu0 %v1498, 56
        %v1590 = vpop.permute.xlu0 %1589
        %1591 = vrot.lane.b32.xlu0 %v1499, 56
        %v1592 = vpop.permute.xlu0 %1591
        %1593 = vrot.lane.b32.xlu0 %v1500, 56
        %v1594 = vpop.permute.xlu0 %1593
        %1595 = vrot.lane.b32.xlu0 %v1501, 56
        %v1596 = vpop.permute.xlu0 %1595
        %1597 = vrot.lane.b32.xlu0 %v1502, 56
        %v1598 = vpop.permute.xlu0 %1597
        %vm1631 = vcmask 523712
        %1632 = vst.msk [vmem:[#allocation2] sm:$0xff] %vm1631, %v1536
        %1633 = vst.msk [vmem:[#allocation2 + $0x8] sm:$0xff] %vm1631, %v1538
        %1634 = vst.msk [vmem:[#allocation2 + $0x10] sm:$0xff] %vm1631, %v1540
        %1635 = vst.msk [vmem:[#allocation2 + $0x18] sm:$0xff] %vm1631, %v1542
        %1636 = vst.msk [vmem:[#allocation2 + $0x20] sm:$0xff] %vm1631, %v1544
        %1637 = vst.msk [vmem:[#allocation2 + $0x28] sm:$0xff] %vm1631, %v1546
        %1638 = vst.msk [vmem:[#allocation2 + $0x30] sm:$0xff] %vm1631, %v1548
        %1639 = vst.msk [vmem:[#allocation2 + $0x38] sm:$0xff] %vm1631, %v1550
        %1640 = vst.msk [vmem:[#allocation2 + $0x40] sm:$0xff] %vm1631, %v1552
        %1641 = vst.msk [vmem:[#allocation2 + $0x48] sm:$0xff] %vm1631, %v1554
        %1642 = vst.msk [vmem:[#allocation2 + $0x50] sm:$0xff] %vm1631, %v1556
        %1643 = vst.msk [vmem:[#allocation2 + $0x58] sm:$0xff] %vm1631, %v1558
        %1644 = vst.msk [vmem:[#allocation2 + $0x60] sm:$0xff] %vm1631, %v1560
        %1645 = vst.msk [vmem:[#allocation2 + $0x68] sm:$0xff] %vm1631, %v1562
        %1646 = vst.msk [vmem:[#allocation2 + $0x70] sm:$0xff] %vm1631, %v1564
        %1647 = vst.msk [vmem:[#allocation2 + $0x78] sm:$0xff] %vm1631, %v1566
        %1648 = vst.msk [vmem:[#allocation2 + $0x80] sm:$0xff] %vm1631, %v1568
        %1649 = vst.msk [vmem:[#allocation2 + $0x88] sm:$0xff] %vm1631, %v1570
        %1650 = vst.msk [vmem:[#allocation2 + $0x90] sm:$0xff] %vm1631, %v1572
        %1651 = vst.msk [vmem:[#allocation2 + $0x98] sm:$0xff] %vm1631, %v1574
        %1652 = vst.msk [vmem:[#allocation2 + $0xa0] sm:$0xff] %vm1631, %v1576
        %1653 = vst.msk [vmem:[#allocation2 + $0xa8] sm:$0xff] %vm1631, %v1578
        %1654 = vst.msk [vmem:[#allocation2 + $0xb0] sm:$0xff] %vm1631, %v1580
        %1655 = vst.msk [vmem:[#allocation2 + $0xb8] sm:$0xff] %vm1631, %v1582
        %1656 = vst.msk [vmem:[#allocation2 + $0xc0] sm:$0xff] %vm1631, %v1584
        %1657 = vst.msk [vmem:[#allocation2 + $0xc8] sm:$0xff] %vm1631, %v1586
        %1658 = vst.msk [vmem:[#allocation2 + $0xd0] sm:$0xff] %vm1631, %v1588
        %1659 = vst.msk [vmem:[#allocation2 + $0xd8] sm:$0xff] %vm1631, %v1590
        %1660 = vst.msk [vmem:[#allocation2 + $0xe0] sm:$0xff] %vm1631, %v1592
        %1661 = vst.msk [vmem:[#allocation2 + $0xe8] sm:$0xff] %vm1631, %v1594
        %1662 = vst.msk [vmem:[#allocation2 + $0xf0] sm:$0xff] %vm1631, %v1596
        %1663 = vst.msk [vmem:[#allocation2 + $0xf8] sm:$0xff] %vm1631, %v1598
        %v1664 = vld [vmem:[%s1277 + $0x2] sm:$0xff]
        %v1665 = vld [vmem:[%s1277 + $0xa] sm:$0xff]
        %v1666 = vld [vmem:[%s1277 + $0x1a] sm:$0xff]
        %v1667 = vld [vmem:[%s1277 + $0x22] sm:$0xff]
        %v1668 = vld [vmem:[%s1277 + $0x32] sm:$0xff]
        %v1669 = vld [vmem:[%s1277 + $0x3a] sm:$0xff]
        %v1670 = vld [vmem:[%s1277 + $0x4a] sm:$0xff]
        %v1671 = vld [vmem:[%s1277 + $0x52] sm:$0xff]
        %v1672 = vld [vmem:[%s1277 + $0x62] sm:$0xff]
        %v1673 = vld [vmem:[%s1277 + $0x6a] sm:$0xff]
        %v1674 = vld [vmem:[%s1277 + $0x7a] sm:$0xff]
        %v1675 = vld [vmem:[%s1277 + $0x82] sm:$0xff]
        %v1676 = vld [vmem:[%s1277 + $0x92] sm:$0xff]
        %v1677 = vld [vmem:[%s1277 + $0x9a] sm:$0xff]
        %v1678 = vld [vmem:[%s1277 + $0xaa] sm:$0xff]
        %v1679 = vld [vmem:[%s1277 + $0xb2] sm:$0xff]
        %v1680 = vld [vmem:[%s1277 + $0xc2] sm:$0xff]
        %v1681 = vld [vmem:[%s1277 + $0xca] sm:$0xff]
        %v1682 = vld [vmem:[%s1277 + $0xda] sm:$0xff]
        %v1683 = vld [vmem:[%s1277 + $0xe2] sm:$0xff]
        %v1684 = vld [vmem:[%s1277 + $0xf2] sm:$0xff]
        %v1685 = vld [vmem:[%s1277 + $0xfa] sm:$0xff]
        %v1686 = vld [vmem:[%s1277 + $0x10a] sm:$0xff]
        %v1687 = vld [vmem:[%s1277 + $0x112] sm:$0xff]
        %v1688 = vld [vmem:[%s1277 + $0x122] sm:$0xff]
        %v1689 = vld [vmem:[%s1277 + $0x12a] sm:$0xff]
        %v1690 = vld [vmem:[%s1277 + $0x13a] sm:$0xff]
        %v1691 = vld [vmem:[%s1277 + $0x142] sm:$0xff]
        %v1692 = vld [vmem:[%s1277 + $0x152] sm:$0xff]
        %v1693 = vld [vmem:[%s1277 + $0x15a] sm:$0xff]
        %v1694 = vld [vmem:[%s1277 + $0x16a] sm:$0xff]
        %v1695 = vld [vmem:[%s1277 + $0x172] sm:$0xff]
        %1728 = vrot.lane.b32.xlu0 %v1664, 64
        %v1729 = vpop.permute.xlu0 %1728
        %1730 = vrot.lane.b32.xlu0 %v1665, 64
        %v1731 = vpop.permute.xlu0 %1730
        %1732 = vrot.lane.b32.xlu0 %v1666, 64
        %v1733 = vpop.permute.xlu0 %1732
        %1734 = vrot.lane.b32.xlu0 %v1667, 64
        %v1735 = vpop.permute.xlu0 %1734
        %1736 = vrot.lane.b32.xlu0 %v1668, 64
        %v1737 = vpop.permute.xlu0 %1736
        %1738 = vrot.lane.b32.xlu0 %v1669, 64
        %v1739 = vpop.permute.xlu0 %1738
        %1740 = vrot.lane.b32.xlu0 %v1670, 64
        %v1741 = vpop.permute.xlu0 %1740
        %1742 = vrot.lane.b32.xlu0 %v1671, 64
        %v1743 = vpop.permute.xlu0 %1742
        %1744 = vrot.lane.b32.xlu0 %v1672, 64
        %v1745 = vpop.permute.xlu0 %1744
        %1746 = vrot.lane.b32.xlu0 %v1673, 64
        %v1747 = vpop.permute.xlu0 %1746
        %1748 = vrot.lane.b32.xlu0 %v1674, 64
        %v1749 = vpop.permute.xlu0 %1748
        %1750 = vrot.lane.b32.xlu0 %v1675, 64
        %v1751 = vpop.permute.xlu0 %1750
        %1752 = vrot.lane.b32.xlu0 %v1676, 64
        %v1753 = vpop.permute.xlu0 %1752
        %1754 = vrot.lane.b32.xlu0 %v1677, 64
        %v1755 = vpop.permute.xlu0 %1754
        %1756 = vrot.lane.b32.xlu0 %v1678, 64
        %v1757 = vpop.permute.xlu0 %1756
        %1758 = vrot.lane.b32.xlu0 %v1679, 64
        %v1759 = vpop.permute.xlu0 %1758
        %1760 = vrot.lane.b32.xlu0 %v1680, 64
        %v1761 = vpop.permute.xlu0 %1760
        %1762 = vrot.lane.b32.xlu0 %v1681, 64
        %v1763 = vpop.permute.xlu0 %1762
        %1764 = vrot.lane.b32.xlu0 %v1682, 64
        %v1765 = vpop.permute.xlu0 %1764
        %1766 = vrot.lane.b32.xlu0 %v1683, 64
        %v1767 = vpop.permute.xlu0 %1766
        %1768 = vrot.lane.b32.xlu0 %v1684, 64
        %v1769 = vpop.permute.xlu0 %1768
        %1770 = vrot.lane.b32.xlu0 %v1685, 64
        %v1771 = vpop.permute.xlu0 %1770
        %1772 = vrot.lane.b32.xlu0 %v1686, 64
        %v1773 = vpop.permute.xlu0 %1772
        %1774 = vrot.lane.b32.xlu0 %v1687, 64
        %v1775 = vpop.permute.xlu0 %1774
        %1776 = vrot.lane.b32.xlu0 %v1688, 64
        %v1777 = vpop.permute.xlu0 %1776
        %1778 = vrot.lane.b32.xlu0 %v1689, 64
        %v1779 = vpop.permute.xlu0 %1778
        %1780 = vrot.lane.b32.xlu0 %v1690, 64
        %v1781 = vpop.permute.xlu0 %1780
        %1782 = vrot.lane.b32.xlu0 %v1691, 64
        %v1783 = vpop.permute.xlu0 %1782
        %1784 = vrot.lane.b32.xlu0 %v1692, 64
        %v1785 = vpop.permute.xlu0 %1784
        %1786 = vrot.lane.b32.xlu0 %v1693, 64
        %v1787 = vpop.permute.xlu0 %1786
        %1788 = vrot.lane.b32.xlu0 %v1694, 64
        %v1789 = vpop.permute.xlu0 %1788
        %1790 = vrot.lane.b32.xlu0 %v1695, 64
        %v1791 = vpop.permute.xlu0 %1790
        %vm1824 = vcmask 589312
        %1825 = vst.msk [vmem:[#allocation2] sm:$0xff] %vm1824, %v1729
        %1826 = vst.msk [vmem:[#allocation2 + $0x8] sm:$0xff] %vm1824, %v1731
        %1827 = vst.msk [vmem:[#allocation2 + $0x10] sm:$0xff] %vm1824, %v1733
        %1828 = vst.msk [vmem:[#allocation2 + $0x18] sm:$0xff] %vm1824, %v1735
        %1829 = vst.msk [vmem:[#allocation2 + $0x20] sm:$0xff] %vm1824, %v1737
        %1830 = vst.msk [vmem:[#allocation2 + $0x28] sm:$0xff] %vm1824, %v1739
        %1831 = vst.msk [vmem:[#allocation2 + $0x30] sm:$0xff] %vm1824, %v1741
        %1832 = vst.msk [vmem:[#allocation2 + $0x38] sm:$0xff] %vm1824, %v1743
        %1833 = vst.msk [vmem:[#allocation2 + $0x40] sm:$0xff] %vm1824, %v1745
        %1834 = vst.msk [vmem:[#allocation2 + $0x48] sm:$0xff] %vm1824, %v1747
        %1835 = vst.msk [vmem:[#allocation2 + $0x50] sm:$0xff] %vm1824, %v1749
        %1836 = vst.msk [vmem:[#allocation2 + $0x58] sm:$0xff] %vm1824, %v1751
        %1837 = vst.msk [vmem:[#allocation2 + $0x60] sm:$0xff] %vm1824, %v1753
        %1838 = vst.msk [vmem:[#allocation2 + $0x68] sm:$0xff] %vm1824, %v1755
        %1839 = vst.msk [vmem:[#allocation2 + $0x70] sm:$0xff] %vm1824, %v1757
        %1840 = vst.msk [vmem:[#allocation2 + $0x78] sm:$0xff] %vm1824, %v1759
        %1841 = vst.msk [vmem:[#allocation2 + $0x80] sm:$0xff] %vm1824, %v1761
        %1842 = vst.msk [vmem:[#allocation2 + $0x88] sm:$0xff] %vm1824, %v1763
        %1843 = vst.msk [vmem:[#allocation2 + $0x90] sm:$0xff] %vm1824, %v1765
        %1844 = vst.msk [vmem:[#allocation2 + $0x98] sm:$0xff] %vm1824, %v1767
        %1845 = vst.msk [vmem:[#allocation2 + $0xa0] sm:$0xff] %vm1824, %v1769
        %1846 = vst.msk [vmem:[#allocation2 + $0xa8] sm:$0xff] %vm1824, %v1771
        %1847 = vst.msk [vmem:[#allocation2 + $0xb0] sm:$0xff] %vm1824, %v1773
        %1848 = vst.msk [vmem:[#allocation2 + $0xb8] sm:$0xff] %vm1824, %v1775
        %1849 = vst.msk [vmem:[#allocation2 + $0xc0] sm:$0xff] %vm1824, %v1777
        %1850 = vst.msk [vmem:[#allocation2 + $0xc8] sm:$0xff] %vm1824, %v1779
        %1851 = vst.msk [vmem:[#allocation2 + $0xd0] sm:$0xff] %vm1824, %v1781
        %1852 = vst.msk [vmem:[#allocation2 + $0xd8] sm:$0xff] %vm1824, %v1783
        %1853 = vst.msk [vmem:[#allocation2 + $0xe0] sm:$0xff] %vm1824, %v1785
        %1854 = vst.msk [vmem:[#allocation2 + $0xe8] sm:$0xff] %vm1824, %v1787
        %1855 = vst.msk [vmem:[#allocation2 + $0xf0] sm:$0xff] %vm1824, %v1789
        %1856 = vst.msk [vmem:[#allocation2 + $0xf8] sm:$0xff] %vm1824, %v1791
        %v1857 = vld [vmem:[#allocation2] sm:$0xff]
        %v1858 = vld [vmem:[#allocation2 + $0x8] sm:$0xff]
        %v1859 = vld [vmem:[#allocation2 + $0x10] sm:$0xff]
        %v1860 = vld [vmem:[#allocation2 + $0x18] sm:$0xff]
        %v1861 = vld [vmem:[#allocation2 + $0x20] sm:$0xff]
        %v1862 = vld [vmem:[#allocation2 + $0x28] sm:$0xff]
        %v1863 = vld [vmem:[#allocation2 + $0x30] sm:$0xff]
        %v1864 = vld [vmem:[#allocation2 + $0x38] sm:$0xff]
        %v1865 = vld [vmem:[#allocation2 + $0x40] sm:$0xff]
        %v1866 = vld [vmem:[#allocation2 + $0x48] sm:$0xff]
        %v1867 = vld [vmem:[#allocation2 + $0x50] sm:$0xff]
        %v1868 = vld [vmem:[#allocation2 + $0x58] sm:$0xff]
        %v1869 = vld [vmem:[#allocation2 + $0x60] sm:$0xff]
        %v1870 = vld [vmem:[#allocation2 + $0x68] sm:$0xff]
        %v1871 = vld [vmem:[#allocation2 + $0x70] sm:$0xff]
        %v1872 = vld [vmem:[#allocation2 + $0x78] sm:$0xff]
        %v1873 = vld [vmem:[#allocation2 + $0x80] sm:$0xff]
        %v1874 = vld [vmem:[#allocation2 + $0x88] sm:$0xff]
        %v1875 = vld [vmem:[#allocation2 + $0x90] sm:$0xff]
        %v1876 = vld [vmem:[#allocation2 + $0x98] sm:$0xff]
        %v1877 = vld [vmem:[#allocation2 + $0xa0] sm:$0xff]
        %v1878 = vld [vmem:[#allocation2 + $0xa8] sm:$0xff]
        %v1879 = vld [vmem:[#allocation2 + $0xb0] sm:$0xff]
        %v1880 = vld [vmem:[#allocation2 + $0xb8] sm:$0xff]
        %v1881 = vld [vmem:[#allocation2 + $0xc0] sm:$0xff]
        %v1882 = vld [vmem:[#allocation2 + $0xc8] sm:$0xff]
        %v1883 = vld [vmem:[#allocation2 + $0xd0] sm:$0xff]
        %v1884 = vld [vmem:[#allocation2 + $0xd8] sm:$0xff]
        %v1885 = vld [vmem:[#allocation2 + $0xe0] sm:$0xff]
        %v1886 = vld [vmem:[#allocation2 + $0xe8] sm:$0xff]
        %v1887 = vld [vmem:[#allocation2 + $0xf0] sm:$0xff]
        %v1888 = vld [vmem:[#allocation2 + $0xf8] sm:$0xff]
        %v1889 = vld [vmem:[%s1] sm:$0xff]
        %v1890 = vld [vmem:[%s1 + $0x8] sm:$0xff]
        %v1891 = vld [vmem:[%s1 + $0x10] sm:$0xff]
        %v1892 = vld [vmem:[%s1 + $0x18] sm:$0xff]
        %v1893 = vld [vmem:[%s1 + $0x20] sm:$0xff]
        %v1894 = vld [vmem:[%s1 + $0x28] sm:$0xff]
        %v1895 = vld [vmem:[%s1 + $0x30] sm:$0xff]
        %v1896 = vld [vmem:[%s1 + $0x38] sm:$0xff]
        %v1897 = vld [vmem:[%s1 + $0x40] sm:$0xff]
        %v1898 = vld [vmem:[%s1 + $0x48] sm:$0xff]
        %v1899 = vld [vmem:[%s1 + $0x50] sm:$0xff]
        %v1900 = vld [vmem:[%s1 + $0x58] sm:$0xff]
        %v1901 = vld [vmem:[%s1 + $0x60] sm:$0xff]
        %v1902 = vld [vmem:[%s1 + $0x68] sm:$0xff]
        %v1903 = vld [vmem:[%s1 + $0x70] sm:$0xff]
        %v1904 = vld [vmem:[%s1 + $0x78] sm:$0xff]
        %1905 = vmatprep.subr.mxu0 0.0
        %1906 = vmatpush1.msra.mxu0 %v1889
        %1907 = vmatprep.subr.mxu0 0.0
        %1908 = vmatpush1.msra.mxu0 %v1890
        %1909 = vmatprep.subr.mxu0 0.0
        %1910 = vmatpush1.msra.mxu0 %v1891
        %1911 = vmatprep.subr.mxu0 0.0
        %1912 = vmatpush1.msra.mxu0 %v1892
        %1913 = vmatprep.subr.mxu0 0.0
        %1914 = vmatpush1.msra.mxu0 %v1893
        %1915 = vmatprep.subr.mxu0 0.0
        %1916 = vmatpush1.msra.mxu0 %v1894
        %1917 = vmatprep.subr.mxu0 0.0
        %1918 = vmatpush1.msra.mxu0 %v1895
        %1919 = vmatprep.subr.mxu0 0.0
        %1920 = vmatpush1.msra.mxu0 %v1896
        %1921 = vmatprep.subr.mxu0 0.0
        %1922 = vmatpush1.msra.mxu0 %v1897
        %1923 = vmatprep.subr.mxu0 0.0
        %1924 = vmatpush1.msra.mxu0 %v1898
        %1925 = vmatprep.subr.mxu0 0.0
        %1926 = vmatpush1.msra.mxu0 %v1899
        %1927 = vmatprep.subr.mxu0 0.0
        %1928 = vmatpush1.msra.mxu0 %v1900
        %1929 = vmatprep.subr.mxu0 0.0
        %1930 = vmatpush1.msra.mxu0 %v1901
        %1931 = vmatprep.subr.mxu0 0.0
        %1932 = vmatpush1.msra.mxu0 %v1902
        %1933 = vmatprep.subr.mxu0 0.0
        %1934 = vmatpush1.msra.mxu0 %v1903
        %1935 = vmatprep.subr.mxu0 0.0
        %1936 = vmatpush1.msra.mxu0 %v1904
        %1937 = vmatprep.subr.mxu0 0.0
        %1938 = vmatpush1.msra.mxu0 0.0
        %1939 = vmatprep.subr.mxu0 0.0
        %1940 = vmatpush1.msra.mxu0 0.0
        %1941 = vmatprep.subr.mxu0 0.0
        %1942 = vmatpush1.msra.mxu0 0.0
        %1943 = vmatprep.subr.mxu0 0.0
        %1944 = vmatpush1.msra.mxu0 0.0
        %1945 = vmatprep.subr.mxu0 0.0
        %1946 = vmatpush1.msra.mxu0 0.0
        %1947 = vmatprep.subr.mxu0 0.0
        %1948 = vmatpush1.msra.mxu0 0.0
        %1949 = vmatprep.subr.mxu0 0.0
        %1950 = vmatpush1.msra.mxu0 0.0
        %1951 = vmatprep.subr.mxu0 0.0
        %1952 = vmatpush1.msra.mxu0 0.0
        %1953 = vmatprep.subr.mxu0 0.0
        %1954 = vmatpush1.msra.mxu0 0.0
        %1955 = vmatprep.subr.mxu0 0.0
        %1956 = vmatpush1.msra.mxu0 0.0
        %1957 = vmatprep.subr.mxu0 0.0
        %1958 = vmatpush1.msra.mxu0 0.0
        %1959 = vmatprep.subr.mxu0 0.0
        %1960 = vmatpush1.msra.mxu0 0.0
        %1961 = vmatprep.subr.mxu0 0.0
        %1962 = vmatpush1.msra.mxu0 0.0
        %1963 = vmatprep.subr.mxu0 0.0
        %1964 = vmatpush1.msra.mxu0 0.0
        %1965 = vmatprep.subr.mxu0 0.0
        %1966 = vmatpush1.msra.mxu0 0.0
        %1967 = vmatprep.subr.mxu0 0.0
        %1968 = vmatpush1.msra.mxu0 0.0
        %1969 = vmatprep.mubr.f32.mxu0 0.0
        %1970 = vmatmul.mubr.f32.gmra.mrb[0].mxu0 %v1857
        %v1971 = vpop.f32.mrb[0].mxu0
        %v1972 = vadd.f32 0.0, %v1971
        %v1973 = vpop.f32.mrb[0].mxu0
        %1974 = vmatprep.mubr.f32.mxu0 0.0
        %1975 = vmatmul.mubr.f32.gmra.mrb[0].mxu0 %v1858
        %v1976 = vpop.f32.mrb[0].mxu0
        %v1977 = vadd.f32 0.0, %v1976
        %v1978 = vpop.f32.mrb[0].mxu0
        %1979 = vmatprep.mubr.f32.mxu0 0.0
        %1980 = vmatmul.mubr.f32.gmra.mrb[0].mxu0 %v1859
        %v1981 = vpop.f32.mrb[0].mxu0
        %v1982 = vadd.f32 0.0, %v1981
        %v1983 = vpop.f32.mrb[0].mxu0
        %1984 = vmatprep.mubr.f32.mxu0 0.0
        %1985 = vmatmul.mubr.f32.gmra.mrb[0].mxu0 %v1860
        %v1986 = vpop.f32.mrb[0].mxu0
        %v1987 = vadd.f32 0.0, %v1986
        %v1988 = vpop.f32.mrb[0].mxu0
        %1989 = vmatprep.mubr.f32.mxu0 0.0
        %1990 = vmatmul.mubr.f32.gmra.mrb[0].mxu0 %v1861
        %v1991 = vpop.f32.mrb[0].mxu0
        %v1992 = vadd.f32 0.0, %v1991
        %v1993 = vpop.f32.mrb[0].mxu0
        %1994 = vmatprep.mubr.f32.mxu0 0.0
        %1995 = vmatmul.mubr.f32.gmra.mrb[0].mxu0 %v1862
        %v1996 = vpop.f32.mrb[0].mxu0
        %v1997 = vadd.f32 0.0, %v1996
        %v1998 = vpop.f32.mrb[0].mxu0
        %1999 = vmatprep.mubr.f32.mxu0 0.0
        %2000 = vmatmul.mubr.f32.gmra.mrb[0].mxu0 %v1863
        %v2001 = vpop.f32.mrb[0].mxu0
        %v2002 = vadd.f32 0.0, %v2001
        %v2003 = vpop.f32.mrb[0].mxu0
        %2004 = vmatprep.mubr.f32.mxu0 0.0
        %2005 = vmatmul.mubr.f32.gmra.mrb[0].mxu0 %v1864
        %v2006 = vpop.f32.mrb[0].mxu0
        %v2007 = vadd.f32 0.0, %v2006
        %v2008 = vpop.f32.mrb[0].mxu0
        %2009 = vmatprep.mubr.f32.mxu0 0.0
        %2010 = vmatmul.mubr.f32.gmra.mrb[0].mxu0 %v1865
        %v2011 = vpop.f32.mrb[0].mxu0
        %v2012 = vadd.f32 0.0, %v2011
        %v2013 = vpop.f32.mrb[0].mxu0
        %2014 = vmatprep.mubr.f32.mxu0 0.0
        %2015 = vmatmul.mubr.f32.gmra.mrb[0].mxu0 %v1866
        %v2016 = vpop.f32.mrb[0].mxu0
        %v2017 = vadd.f32 0.0, %v2016
        %v2018 = vpop.f32.mrb[0].mxu0
        %2019 = vmatprep.mubr.f32.mxu0 0.0
        %2020 = vmatmul.mubr.f32.gmra.mrb[0].mxu0 %v1867
        %v2021 = vpop.f32.mrb[0].mxu0
        %v2022 = vadd.f32 0.0, %v2021
        %v2023 = vpop.f32.mrb[0].mxu0
        %2024 = vmatprep.mubr.f32.mxu0 0.0
        %2025 = vmatmul.mubr.f32.gmra.mrb[0].mxu0 %v1868
        %v2026 = vpop.f32.mrb[0].mxu0
        %v2027 = vadd.f32 0.0, %v2026
        %v2028 = vpop.f32.mrb[0].mxu0
        %2029 = vmatprep.mubr.f32.mxu0 0.0
        %2030 = vmatmul.mubr.f32.gmra.mrb[0].mxu0 %v1869
        %v2031 = vpop.f32.mrb[0].mxu0
        %v2032 = vadd.f32 0.0, %v2031
        %v2033 = vpop.f32.mrb[0].mxu0
        %2034 = vmatprep.mubr.f32.mxu0 0.0
        %2035 = vmatmul.mubr.f32.gmra.mrb[0].mxu0 %v1870
        %v2036 = vpop.f32.mrb[0].mxu0
        %v2037 = vadd.f32 0.0, %v2036
        %v2038 = vpop.f32.mrb[0].mxu0
        %2039 = vmatprep.mubr.f32.mxu0 0.0
        %2040 = vmatmul.mubr.f32.gmra.mrb[0].mxu0 %v1871
        %v2041 = vpop.f32.mrb[0].mxu0
        %v2042 = vadd.f32 0.0, %v2041
        %v2043 = vpop.f32.mrb[0].mxu0
        %2044 = vmatprep.mubr.f32.mxu0 0.0
        %2045 = vmatmul.mubr.f32.gmra.mrb[0].mxu0 %v1872
        %v2046 = vpop.f32.mrb[0].mxu0
        %v2047 = vadd.f32 0.0, %v2046
        %v2048 = vpop.f32.mrb[0].mxu0
        %2049 = vmatprep.mubr.f32.mxu0 0.0
        %2050 = vmatmul.mubr.f32.gmra.mrb[0].mxu0 %v1873
        %v2051 = vpop.f32.mrb[0].mxu0
        %v2052 = vadd.f32 0.0, %v2051
        %v2053 = vpop.f32.mrb[0].mxu0
        %2054 = vmatprep.mubr.f32.mxu0 0.0
        %2055 = vmatmul.mubr.f32.gmra.mrb[0].mxu0 %v1874
        %v2056 = vpop.f32.mrb[0].mxu0
        %v2057 = vadd.f32 0.0, %v2056
        %v2058 = vpop.f32.mrb[0].mxu0
        %2059 = vmatprep.mubr.f32.mxu0 0.0
        %2060 = vmatmul.mubr.f32.gmra.mrb[0].mxu0 %v1875
        %v2061 = vpop.f32.mrb[0].mxu0
        %v2062 = vadd.f32 0.0, %v2061
        %v2063 = vpop.f32.mrb[0].mxu0
        %2064 = vmatprep.mubr.f32.mxu0 0.0
        %2065 = vmatmul.mubr.f32.gmra.mrb[0].mxu0 %v1876
        %v2066 = vpop.f32.mrb[0].mxu0
        %v2067 = vadd.f32 0.0, %v2066
        %v2068 = vpop.f32.mrb[0].mxu0
        %2069 = vmatprep.mubr.f32.mxu0 0.0
        %2070 = vmatmul.mubr.f32.gmra.mrb[0].mxu0 %v1877
        %v2071 = vpop.f32.mrb[0].mxu0
        %v2072 = vadd.f32 0.0, %v2071
        %v2073 = vpop.f32.mrb[0].mxu0
        %2074 = vmatprep.mubr.f32.mxu0 0.0
        %2075 = vmatmul.mubr.f32.gmra.mrb[0].mxu0 %v1878
        %v2076 = vpop.f32.mrb[0].mxu0
        %v2077 = vadd.f32 0.0, %v2076
        %v2078 = vpop.f32.mrb[0].mxu0
        %2079 = vmatprep.mubr.f32.mxu0 0.0
        %2080 = vmatmul.mubr.f32.gmra.mrb[0].mxu0 %v1879
        %v2081 = vpop.f32.mrb[0].mxu0
        %v2082 = vadd.f32 0.0, %v2081
        %v2083 = vpop.f32.mrb[0].mxu0
        %2084 = vmatprep.mubr.f32.mxu0 0.0
        %2085 = vmatmul.mubr.f32.gmra.mrb[0].mxu0 %v1880
        %v2086 = vpop.f32.mrb[0].mxu0
        %v2087 = vadd.f32 0.0, %v2086
        %v2088 = vpop.f32.mrb[0].mxu0
        %2089 = vmatprep.mubr.f32.mxu0 0.0
        %2090 = vmatmul.mubr.f32.gmra.mrb[0].mxu0 %v1881
        %v2091 = vpop.f32.mrb[0].mxu0
        %v2092 = vadd.f32 0.0, %v2091
        %v2093 = vpop.f32.mrb[0].mxu0
        %2094 = vmatprep.mubr.f32.mxu0 0.0
        %2095 = vmatmul.mubr.f32.gmra.mrb[0].mxu0 %v1882
        %v2096 = vpop.f32.mrb[0].mxu0
        %v2097 = vadd.f32 0.0, %v2096
        %v2098 = vpop.f32.mrb[0].mxu0
        %2099 = vmatprep.mubr.f32.mxu0 0.0
        %2100 = vmatmul.mubr.f32.gmra.mrb[0].mxu0 %v1883
        %v2101 = vpop.f32.mrb[0].mxu0
        %v2102 = vadd.f32 0.0, %v2101
        %v2103 = vpop.f32.mrb[0].mxu0
        %2104 = vmatprep.mubr.f32.mxu0 0.0
        %2105 = vmatmul.mubr.f32.gmra.mrb[0].mxu0 %v1884
        %v2106 = vpop.f32.mrb[0].mxu0
        %v2107 = vadd.f32 0.0, %v2106
        %v2108 = vpop.f32.mrb[0].mxu0
        %2109 = vmatprep.mubr.f32.mxu0 0.0
        %2110 = vmatmul.mubr.f32.gmra.mrb[0].mxu0 %v1885
        %v2111 = vpop.f32.mrb[0].mxu0
        %v2112 = vadd.f32 0.0, %v2111
        %v2113 = vpop.f32.mrb[0].mxu0
        %2114 = vmatprep.mubr.f32.mxu0 0.0
        %2115 = vmatmul.mubr.f32.gmra.mrb[0].mxu0 %v1886
        %v2116 = vpop.f32.mrb[0].mxu0
        %v2117 = vadd.f32 0.0, %v2116
        %v2118 = vpop.f32.mrb[0].mxu0
        %2119 = vmatprep.mubr.f32.mxu0 0.0
        %2120 = vmatmul.mubr.f32.gmra.mrb[0].mxu0 %v1887
        %v2121 = vpop.f32.mrb[0].mxu0
        %v2122 = vadd.f32 0.0, %v2121
        %v2123 = vpop.f32.mrb[0].mxu0
        %2124 = vmatprep.mubr.f32.mxu0 0.0
        %2125 = vmatmul.mubr.f32.gmra.mrb[0].mxu0 %v1888
        %v2126 = vpop.f32.mrb[0].mxu0
        %v2127 = vadd.f32 0.0, %v2126
        %v2128 = vpop.f32.mrb[0].mxu0
        %2129 = vdwg.mxu0
        %2130 = vst [vmem:[%s194] sm:$0xff] %v1972
        %2131 = vst [vmem:[%s194 + $0x8] sm:$0xff] %v1977
        %2132 = vst [vmem:[%s194 + $0x10] sm:$0xff] %v1982
        %2133 = vst [vmem:[%s194 + $0x18] sm:$0xff] %v1987
        %2134 = vst [vmem:[%s194 + $0x20] sm:$0xff] %v1992
        %2135 = vst [vmem:[%s194 + $0x28] sm:$0xff] %v1997
        %2136 = vst [vmem:[%s194 + $0x30] sm:$0xff] %v2002
        %2137 = vst [vmem:[%s194 + $0x38] sm:$0xff] %v2007
        %2138 = vst [vmem:[%s194 + $0x40] sm:$0xff] %v2012
        %2139 = vst [vmem:[%s194 + $0x48] sm:$0xff] %v2017
        %2140 = vst [vmem:[%s194 + $0x50] sm:$0xff] %v2022
        %2141 = vst [vmem:[%s194 + $0x58] sm:$0xff] %v2027
        %2142 = vst [vmem:[%s194 + $0x60] sm:$0xff] %v2032
        %2143 = vst [vmem:[%s194 + $0x68] sm:$0xff] %v2037
        %2144 = vst [vmem:[%s194 + $0x70] sm:$0xff] %v2042
        %2145 = vst [vmem:[%s194 + $0x78] sm:$0xff] %v2047
        %2146 = vst [vmem:[%s194 + $0x80] sm:$0xff] %v2052
        %2147 = vst [vmem:[%s194 + $0x88] sm:$0xff] %v2057
        %2148 = vst [vmem:[%s194 + $0x90] sm:$0xff] %v2062
        %2149 = vst [vmem:[%s194 + $0x98] sm:$0xff] %v2067
        %2150 = vst [vmem:[%s194 + $0xa0] sm:$0xff] %v2072
        %2151 = vst [vmem:[%s194 + $0xa8] sm:$0xff] %v2077
        %2152 = vst [vmem:[%s194 + $0xb0] sm:$0xff] %v2082
        %2153 = vst [vmem:[%s194 + $0xb8] sm:$0xff] %v2087
        %2154 = vst [vmem:[%s194 + $0xc0] sm:$0xff] %v2092
        %2155 = vst [vmem:[%s194 + $0xc8] sm:$0xff] %v2097
        %2156 = vst [vmem:[%s194 + $0xd0] sm:$0xff] %v2102
        %2157 = vst [vmem:[%s194 + $0xd8] sm:$0xff] %v2107
        %2158 = vst [vmem:[%s194 + $0xe0] sm:$0xff] %v2112
        %2159 = vst [vmem:[%s194 + $0xe8] sm:$0xff] %v2117
        %2160 = vst [vmem:[%s194 + $0xf0] sm:$0xff] %v2122
        %2161 = vst [vmem:[%s194 + $0xf8] sm:$0xff] %v2127
        %v2162 = vadd.f32 %v1972, %v1977
        %v2163 = vadd.f32 %v2162, %v1982
        %v2164 = vadd.f32 %v2163, %v1987
        %v2165 = vadd.f32 %v2164, %v1992
        %v2166 = vadd.f32 %v2165, %v1997
        %v2167 = vadd.f32 %v2166, %v2002
        %v2168 = vadd.f32 %v2167, %v2007
        %v2169 = vadd.f32 %v2168, %v2012
        %v2170 = vadd.f32 %v2169, %v2017
        %v2171 = vadd.f32 %v2170, %v2022
        %v2172 = vadd.f32 %v2171, %v2027
        %v2173 = vadd.f32 %v2172, %v2032
        %v2174 = vadd.f32 %v2173, %v2037
        %v2175 = vadd.f32 %v2174, %v2042
        %v2176 = vadd.f32 %v2175, %v2047
        %v2177 = vadd.f32 %v2176, %v2052
        %v2178 = vadd.f32 %v2177, %v2057
        %v2179 = vadd.f32 %v2178, %v2062
        %v2180 = vadd.f32 %v2179, %v2067
        %v2181 = vadd.f32 %v2180, %v2072
        %v2182 = vadd.f32 %v2181, %v2077
        %v2183 = vadd.f32 %v2182, %v2082
        %v2184 = vadd.f32 %v2183, %v2087
        %v2185 = vadd.f32 %v2184, %v2092
        %v2186 = vadd.f32 %v2185, %v2097
        %v2187 = vadd.f32 %v2186, %v2102
        %v2188 = vadd.f32 %v2187, %v2107
        %v2189 = vadd.f32 %v2188, %v2112
        %v2190 = vadd.f32 %v2189, %v2117
        %v2191 = vadd.f32 %v2190, %v2122
        %v2192 = vadd.f32 %v2191, %v2127
        %v2193 = vrot.slane %v2192, 4
        %v2194 = vadd.f32 %v2192, %v2193
        %v2195 = vrot.slane %v2194, 2
        %v2196 = vadd.f32 %v2194, %v2195
        %v2197 = vrot.slane %v2196, 1
        %v2198 = vadd.f32 %v2196, %v2197
        %2199 = vst [vmem:[%s200] sm:$0x1] %v2198
        %v2200 = vmul.f32 %v1972, %v1972
        %v2201 = vmul.f32 %v1977, %v1977
        %v2202 = vmul.f32 %v1982, %v1982
        %v2203 = vmul.f32 %v1987, %v1987
        %v2204 = vmul.f32 %v1992, %v1992
        %v2205 = vmul.f32 %v1997, %v1997
        %v2206 = vmul.f32 %v2002, %v2002
        %v2207 = vmul.f32 %v2007, %v2007
        %v2208 = vmul.f32 %v2012, %v2012
        %v2209 = vmul.f32 %v2017, %v2017
        %v2210 = vmul.f32 %v2022, %v2022
        %v2211 = vmul.f32 %v2027, %v2027
        %v2212 = vmul.f32 %v2032, %v2032
        %v2213 = vmul.f32 %v2037, %v2037
        %v2214 = vmul.f32 %v2042, %v2042
        %v2215 = vmul.f32 %v2047, %v2047
        %v2216 = vmul.f32 %v2052, %v2052
        %v2217 = vmul.f32 %v2057, %v2057
        %v2218 = vmul.f32 %v2062, %v2062
        %v2219 = vmul.f32 %v2067, %v2067
        %v2220 = vmul.f32 %v2072, %v2072
        %v2221 = vmul.f32 %v2077, %v2077
        %v2222 = vmul.f32 %v2082, %v2082
        %v2223 = vmul.f32 %v2087, %v2087
        %v2224 = vmul.f32 %v2092, %v2092
        %v2225 = vmul.f32 %v2097, %v2097
        %v2226 = vmul.f32 %v2102, %v2102
        %v2227 = vmul.f32 %v2107, %v2107
        %v2228 = vmul.f32 %v2112, %v2112
        %v2229 = vmul.f32 %v2117, %v2117
        %v2230 = vmul.f32 %v2122, %v2122
        %v2231 = vmul.f32 %v2127, %v2127
        %v2232 = vadd.f32 %v2200, %v2201
        %v2233 = vadd.f32 %v2232, %v2202
        %v2234 = vadd.f32 %v2233, %v2203
        %v2235 = vadd.f32 %v2234, %v2204
        %v2236 = vadd.f32 %v2235, %v2205
        %v2237 = vadd.f32 %v2236, %v2206
        %v2238 = vadd.f32 %v2237, %v2207
        %v2239 = vadd.f32 %v2238, %v2208
        %v2240 = vadd.f32 %v2239, %v2209
        %v2241 = vadd.f32 %v2240, %v2210
        %v2242 = vadd.f32 %v2241, %v2211
        %v2243 = vadd.f32 %v2242, %v2212
        %v2244 = vadd.f32 %v2243, %v2213
        %v2245 = vadd.f32 %v2244, %v2214
        %v2246 = vadd.f32 %v2245, %v2215
        %v2247 = vadd.f32 %v2246, %v2216
        %v2248 = vadd.f32 %v2247, %v2217
        %v2249 = vadd.f32 %v2248, %v2218
        %v2250 = vadd.f32 %v2249, %v2219
        %v2251 = vadd.f32 %v2250, %v2220
        %v2252 = vadd.f32 %v2251, %v2221
        %v2253 = vadd.f32 %v2252, %v2222
        %v2254 = vadd.f32 %v2253, %v2223
        %v2255 = vadd.f32 %v2254, %v2224
        %v2256 = vadd.f32 %v2255, %v2225
        %v2257 = vadd.f32 %v2256, %v2226
        %v2258 = vadd.f32 %v2257, %v2227
        %v2259 = vadd.f32 %v2258, %v2228
        %v2260 = vadd.f32 %v2259, %v2229
        %v2261 = vadd.f32 %v2260, %v2230
        %v2262 = vadd.f32 %v2261, %v2231
        %v2263 = vrot.slane %v2262, 4
        %v2264 = vadd.f32 %v2262, %v2263
        %v2265 = vrot.slane %v2264, 2
        %v2266 = vadd.f32 %v2264, %v2265
        %v2267 = vrot.slane %v2266, 1
        %v2268 = vadd.f32 %v2266, %v2267
        %2269 = vst [vmem:[%s206] sm:$0x1] %v2268
        %s2270 = sand.u32 %s77, 1
        %s2271 = scalar_lea.sflag [#allocation4], %s2270
        %s2272 = sand.u32 %s77, 1
        %s2273 = smul.addr %s2272, 256
        %s2274 = scalar_lea.vmem [#allocation3], %s2273
        %s2275 = sand.u32 %s22, 1
        %s2276 = scalar_lea.sflag [#allocation6], %s2275
        %s2277 = sand.u32 %s103, 1
        %s2278 = scalar_lea.vmem [#allocation5], %s2277
        %s2279 = sand.u32 %s22, 1
        %s2280 = scalar_lea.sflag [#allocation6], %s2279
        %s2281 = sand.u32 %s129, 1
        %s2282 = scalar_lea.vmem [#allocation7], %s2281
        // Predicated region
        $region29: #{tpu_custom_call.1} parent=27 // pred_check
          %p2283 = pneg %p87
        $region30: #{tpu_custom_call.1} parent=27 // pred_check_branch
          %2285 = sbr.rel (%p2283) target = $region32
        $region31: #{tpu_custom_call.1} parent=27 // pred_region
          %s2286 = smul.u32 32, %s22
          %s2288 = ssub.s32 4096, 4096
          %2289 = vsyncadd %s2271, %s2288
          %s2290 = smul.addr %s2286, 128
          %s2291 = scalar_lea.hbm %s2, %s2290
          %s2292 = sshll.u32 %s2274, 4
          %s2293 = int_to_ptr.vmem [resolvable:$true] %s2292
          %2298 = dma.vmem_to_hbm [thread:$0]  %s2293, 4096, %s2291, %s2271, 128, 128, 8
        $region32: #{tpu_custom_call.1} parent=27 // pred_fallthru
          _
        // Predicated region
        $region33: #{tpu_custom_call.1} parent=27 // pred_check
          %p2299 = pneg %p113
        $region34: #{tpu_custom_call.1} parent=27 // pred_check_branch
          %2301 = sbr.rel (%p2299) target = $region36
        $region35: #{tpu_custom_call.1} parent=27 // pred_region
          %s2303 = ssub.s32 16, 16
          %2304 = vsyncadd %s2276, %s2303
          %s2305 = smul.addr %s22, 16
          %s2306 = scalar_lea.hbm %s3, %s2305
          %s2308 = sshll.u32 %s2278, 4
          %s2309 = int_to_ptr.vmem [resolvable:$true] %s2308
          %2311 = dma.vmem_to_hbm [thread:$0]  %s2309, 16, %s2306, %s2276
        $region36: #{tpu_custom_call.1} parent=27 // pred_fallthru
          _
        // Predicated region
        $region37: #{tpu_custom_call.1} parent=27 // pred_check
          %p2312 = pneg %p139
        $region38: #{tpu_custom_call.1} parent=27 // pred_check_branch
          %2314 = sbr.rel (%p2312) target = $region40
        $region39: #{tpu_custom_call.1} parent=27 // pred_region
          %s2316 = ssub.s32 16, 16
          %2317 = vsyncadd %s2280, %s2316
          %s2318 = smul.addr %s22, 16
          %s2319 = scalar_lea.hbm %s4, %s2318
          %s2321 = sshll.u32 %s2282, 4
          %s2322 = int_to_ptr.vmem [resolvable:$true] %s2321
          %2324 = dma.vmem_to_hbm [thread:$0]  %s2322, 16, %s2319, %s2280
        $region40: #{tpu_custom_call.1} parent=27 // pred_fallthru
          _
      $region28: #{tpu_custom_call.1} parent=5 // pred_fallthru
        _
      %p2325 = scmp.le.s32.totalorder 2, %s17
      // Predicated region
      $region41: #{tpu_custom_call.1} parent=5 // pred_check
        %p2326 = pneg %p2325
      $region42: #{tpu_custom_call.1} parent=5 // pred_check_branch
        %2328 = sbr.rel (%p2326) target = $region44
      $region43: #{tpu_custom_call.1} parent=5 // pred_region
        %s2329 = ssub.s32 %s17, 2
        // Predicated region
        $region45: #{tpu_custom_call.1} parent=43 // pred_check
          %p2330 = pneg %p93
        $region46: #{tpu_custom_call.1} parent=43 // pred_check_branch
          %2332 = sbr.rel (%p2330) target = $region48
        $region47: #{tpu_custom_call.1} parent=43 // pred_region
          %s2333 = sand.u32 %s78, 1
          %s2334 = scalar_lea.sflag [#allocation4], %s2333
          %s2335 = sand.u32 %s78, 1
          %s2336 = smul.addr %s2335, 256
          %s2337 = scalar_lea.vmem [#allocation3], %s2336
          %2338 = dma.done %s2334, 4096
        $region48: #{tpu_custom_call.1} parent=43 // pred_fallthru
          _
        // Predicated region
        $region49: #{tpu_custom_call.1} parent=43 // pred_check
          %p2339 = pneg %p119
        $region50: #{tpu_custom_call.1} parent=43 // pred_check_branch
          %2341 = sbr.rel (%p2339) target = $region52
        $region51: #{tpu_custom_call.1} parent=43 // pred_region
          %s2342 = sand.u32 %s23, 1
          %s2343 = scalar_lea.sflag [#allocation6], %s2342
          %s2344 = sand.u32 %s104, 1
          %s2345 = scalar_lea.vmem [#allocation5], %s2344
          %2346 = dma.done %s2343, 16
        $region52: #{tpu_custom_call.1} parent=43 // pred_fallthru
          _
        // Predicated region
        $region53: #{tpu_custom_call.1} parent=43 // pred_check
          %p2347 = pneg %p145
        $region54: #{tpu_custom_call.1} parent=43 // pred_check_branch
          %2349 = sbr.rel (%p2347) target = $region56
        $region55: #{tpu_custom_call.1} parent=43 // pred_region
          %s2350 = sand.u32 %s23, 1
          %s2351 = scalar_lea.sflag [#allocation6], %s2350
          %s2352 = sand.u32 %s130, 1
          %s2353 = scalar_lea.vmem [#allocation7], %s2352
          %2354 = dma.done %s2351, 16
        $region56: #{tpu_custom_call.1} parent=43 // pred_fallthru
          _
      $region44: #{tpu_custom_call.1} parent=5 // pred_fallthru
        _
    $region6: #{tpu_custom_call.1} parent=1 // loop_footer
      %s21 = sadd.s32 1, %s17
    $region7: #{tpu_custom_call.1} parent=1 // loop_footer_branch
      %16 = sbr.rel target = $region3
    $region8: #{tpu_custom_call.1} parent=1 // loop_exit
      _
    %2355 = vsyncpa [#allocation4], 1
    %s2356 = scalar_lea.sflag [#allocation4], 1
    %2357 = vsyncpa %s2356, 1
    %2358 = vsyncpa [#allocation6], 1
    %s2359 = scalar_lea.sflag [#allocation6], 1
    %2360 = vsyncpa %s2359, 1

</llo_original>
